<compile_context>
chip_gen: v7x
topology: tpu7x:2x2x1
jax: 0.10.0
libtpu: 0.0.40
codegen_flags: <defaults>
</compile_context>

<pallas_src>
import math
import functools

import jax
import jax.numpy as jnp
from jax import lax
from jax.experimental import pallas as pl
from jax.experimental.pallas import tpu as pltpu


# ----------------------------- in-kernel helpers -----------------------------

def _layer_norm(x, gamma, beta, eps=1e-12):
    # Matches the custom LayerNorm used in ContrastVAE (mean/var over last dim).
    u = jnp.mean(x, axis=-1, keepdims=True)
    d = x - u
    s = jnp.mean(d * d, axis=-1, keepdims=True)
    return gamma * (d * lax.rsqrt(s + eps)) + beta


def _gelu(x, approx=False):
    if approx:
        # tanh approximation routes through the EUP (its own VLIW slot) instead
        # of the long erf VALU polynomial.  Numerics deviation from ACT2FN["gelu"].
        c = math.sqrt(2.0 / math.pi)
        return 0.5 * x * (1.0 + jnp.tanh(c * (x + 0.044715 * x * x * x)))
    # Exact erf-based GELU (ACT2FN["gelu"] in the reference code).
    return x * 0.5 * (1.0 + lax.erf(x / math.sqrt(2.0)))


# --------------------------------- kernel ------------------------------------

def decoder_kernel(seqs_ref, ids_ref, pos_emb_ref,
                   ln_emb_g_ref, ln_emb_b_ref,
                   wqkv_ref, bqkv_ref, wo_ref, bo_ref,
                   ln1_g_ref, ln1_b_ref,
                   w1_ref, b1_ref, w2_ref, b2_ref,
                   ln2_g_ref, ln2_b_ref,
                   out_ref, *, num_layers, num_heads, seq_len, hidden,
                   batch_block, approx_gelu):
    L, H, NH, BB = seq_len, hidden, num_heads, batch_block
    hd = H // NH
    T = BB * L
    bf16, f32 = jnp.bfloat16, jnp.float32

    # ----- additive attention masks (key padding AND causal), one per batch row
    q_idx = lax.broadcasted_iota(jnp.int32, (L, L), 0)
    k_idx = lax.broadcasted_iota(jnp.int32, (L, L), 1)
    causal = k_idx <= q_idx                                   # lower tri incl. diag
    masks = []
    for bi in range(BB):
        key_valid = ids_ref[bi] > 0                           # (1, L): keys on lanes
        valid = jnp.logical_and(key_valid, causal)            # -> (L, L)
        masks.append(jnp.where(valid, 0.0, -10000.0).astype(f32)[None])  # (1, L, L)

    # ----- embedding stage: + positions, LayerNorm (dropout = identity in eval)
    x = seqs_ref[...]                                         # (BB, L, H) f32
    h0 = _layer_norm(x + pos_emb_ref[...], ln_emb_g_ref[...], ln_emb_b_ref[...])
    h = h0.reshape(T, H)                                      # flat token slab

    # ----- transformer layers ------------------------------------------------
    def layer_body(l, h):
        hb = h.astype(bf16)
        # Fused QKV projection on the whole slab: one fat MXU matmul
        # (1/sqrt(hd) is already folded into the Q columns / bias).
        qkv = jnp.dot(hb, wqkv_ref[l], preferred_element_type=f32) + bqkv_ref[l]
        qkv3 = qkv.reshape(BB, L, 3 * H)

        ctx_rows = []
        for bi in range(BB):                                  # (L,L) stage is per row
            rs = qkv3[bi]                                     # (L, 3H)
            qh = jnp.stack([rs[:, h_ * hd:(h_ + 1) * hd] for h_ in range(NH)], 0)
            kh = jnp.stack([rs[:, H + h_ * hd:H + (h_ + 1) * hd] for h_ in range(NH)], 0)
            vh = jnp.stack([rs[:, 2 * H + h_ * hd:2 * H + (h_ + 1) * hd] for h_ in range(NH)], 0)

            s = jnp.einsum('hqe,hke->hqk', qh.astype(bf16), kh.astype(bf16),
                           preferred_element_type=f32)        # (NH, L, L)
            s = s + masks[bi]
            s = s - jnp.max(s, axis=-1, keepdims=True)        # stable softmax
            p = jnp.exp(s)
            # EUP reciprocal: tiny relative error vs exact division (inference-ok).
            p = p * pl.reciprocal(jnp.sum(p, axis=-1, keepdims=True), approx=True)
            # attention-prob dropout is identity in eval mode
            ctx = jnp.einsum('hqk,hke->hqe', p.astype(bf16), vh.astype(bf16),
                             preferred_element_type=f32)      # (NH, L, hd)
            # concat heads back along lanes -> (L, H)
            ctx_rows.append(jnp.concatenate([ctx[h_] for h_ in range(NH)], axis=-1))

        ctx_slab = ctx_rows[0] if BB == 1 else jnp.concatenate(ctx_rows, axis=0)

        # Output projection: single contraction over full H; the per-head
        # reduction happens inside the MXU accumulator.
        attn = jnp.dot(ctx_slab.astype(bf16), wo_ref[l],
                       preferred_element_type=f32) + bo_ref[l]
        h = _layer_norm(attn + h, ln1_g_ref[l], ln1_b_ref[l])

        # Feed-forward on the slab.
        inter = jnp.dot(h.astype(bf16), w1_ref[l],
                        preferred_element_type=f32) + b1_ref[l]
        inter = _gelu(inter, approx=approx_gelu)
        ffn = jnp.dot(inter.astype(bf16), w2_ref[l],
                      preferred_element_type=f32) + b2_ref[l]
        return _layer_norm(ffn + h, ln2_g_ref[l], ln2_b_ref[l])

    h = lax.fori_loop(0, num_layers, layer_body, h, unroll=True)

    out_ref[...] = h.reshape(BB, L, H).astype(out_ref.dtype)


# --------------------------------- wrapper -----------------------------------

def decoder_forward(seqs, seqs_data, prep, *, num_layers, num_heads,
                    batch_block=None, approx_gelu=False):
    B, L, H = seqs.shape

    # Single-TensorCore chips (v5e/v6e): one grid step (no pipeline-step overhead).
    # On v7x pass batch_block=B//2 to shard the batch over both TensorCores.
    if batch_block is None:
        batch_block = B
    assert B % batch_block == 0, (B, batch_block)
    num_blocks = B // batch_block
    grid = (num_blocks,)

    # (B, L) -> (B, 1, L): block's last two dims equal full array dims (clean tile).
    ids3 = seqs_data.reshape(B, 1, L).astype(jnp.int32)
    pos_emb_l = prep["pos_emb"][:L]                    # first L positions

    weight_args = (
        pos_emb_l, prep["ln_emb_g"], prep["ln_emb_b"],
        prep["wqkv"], prep["bqkv"], prep["wo"], prep["bo"],
        prep["ln1_g"], prep["ln1_b"],
        prep["w1"], prep["b1"], prep["w2"], prep["b2"],
        prep["ln2_g"], prep["ln2_b"],
    )

    # Weights are grid-invariant (constant index_map).  With a multi-step grid,
    # single-buffer them: no re-DMA ever happens, and it halves the weight VMEM
    # footprint (matters on v7x's 64 MiB VMEM at realistic H / num_layers).
    single_buffer_weights = num_blocks > 1

    def rep_spec(arr):
        nd = arr.ndim
        idx = lambda b, _nd=nd: (0,) * _nd
        if single_buffer_weights:
            return pl.BlockSpec(arr.shape, idx, pipeline_mode=pl.Buffered(1))
        return pl.BlockSpec(arr.shape, idx)

    # VMEM budget from the actual resident footprint, with headroom for tile
    # padding and in-kernel intermediates; capped at v7x's 64 MiB physical VMEM.
    def nbytes(a):
        return int(a.size) * a.dtype.itemsize
    w_bufs = 1 if single_buffer_weights else 2
    resident = w_bufs * sum(nbytes(w) for w in weight_args)
    resident += 2 * (2 * batch_block * L * H * 4 + batch_block * L * 4)  # in/out/ids blocks, 2-buf
    vmem_limit = int(min(max(4 * resident + (8 << 20), 16 << 20), 64 << 20))

    kernel = functools.partial(
        decoder_kernel, num_layers=num_layers, num_heads=num_heads,
        seq_len=L, hidden=H, batch_block=batch_block, approx_gelu=approx_gelu)

    return pl.pallas_call(
        kernel,
        out_shape=jax.ShapeDtypeStruct((B, L, H), jnp.float32),
        grid_spec=pltpu.PrefetchScalarGridSpec(
            num_scalar_prefetch=0,
            grid=grid,
            in_specs=[
                pl.BlockSpec((batch_block, L, H), lambda b: (b, 0, 0)),   # seqs
                pl.BlockSpec((batch_block, 1, L), lambda b: (b, 0, 0)),   # seqs_data
            ] + [rep_spec(w) for w in weight_args],
            out_specs=pl.BlockSpec((batch_block, L, H), lambda b: (b, 0, 0)),
        ),
        compiler_params=pltpu.CompilerParams(
            dimension_semantics=("parallel",),
            vmem_limit_bytes=vmem_limit),
    )(seqs, ids3, *weight_args)


# ------------------------------- param prep ----------------------------------

def init_params(key, *, max_len, hidden, num_layers, ffn_mult=4, init_std=0.02):
    H, NL, FF = hidden, num_layers, ffn_mult * hidden
    ks = jax.random.split(key, 8)

    def nrm(k, shape):
        return (init_std * jax.random.normal(k, shape)).astype(jnp.float32)

    # NOTE: trained nn.Linear weights are stored (out,in) and used as x @ W.T;
    # this kernel computes x @ W, so real checkpoints must be transposed here.
    return {
        "pos_emb": nrm(ks[0], (max_len, H)),
        "ln_emb_g": jnp.ones((1, H), jnp.float32),
        "ln_emb_b": jnp.zeros((1, H), jnp.float32),
        "wq": nrm(ks[1], (NL, H, H)), "bq": jnp.zeros((NL, 1, H), jnp.float32),
        "wk": nrm(ks[2], (NL, H, H)), "bk": jnp.zeros((NL, 1, H), jnp.float32),
        "wv": nrm(ks[3], (NL, H, H)), "bv": jnp.zeros((NL, 1, H), jnp.float32),
        "wo": nrm(ks[4], (NL, H, H)), "bo": jnp.zeros((NL, 1, H), jnp.float32),
        "ln1_g": jnp.ones((NL, 1, H), jnp.float32),
        "ln1_b": jnp.zeros((NL, 1, H), jnp.float32),
        "w1": nrm(ks[5], (NL, H, FF)), "b1": jnp.zeros((NL, 1, FF), jnp.float32),
        "w2": nrm(ks[6], (NL, FF, H)), "b2": jnp.zeros((NL, 1, H), jnp.float32),
        "ln2_g": jnp.ones((NL, 1, H), jnp.float32),
        "ln2_b": jnp.zeros((NL, 1, H), jnp.float32),
    }


def prepare_params(params, *, num_heads):
    """One-time weight transform: fused QKV (H, 3H), 1/sqrt(hd) folded into the
    Q columns + bias, bf16 MXU weights, f32 biases / norms."""
    NL, H, _ = params["wq"].shape
    assert H % num_heads == 0
    hd = H // num_heads
    scale = 1.0 / math.sqrt(hd)
    bf16, f32 = jnp.bfloat16, jnp.float32

    wqkv = jnp.concatenate(
        [params["wq"] * scale, params["wk"], params["wv"]], axis=-1)   # (NL, H, 3H)
    bqkv = jnp.concatenate(
        [params["bq"] * scale, params["bk"], params["bv"]], axis=-1)   # (NL, 1, 3H)

    return {
        "pos_emb": params["pos_emb"].astype(f32),
        "ln_emb_g": params["ln_emb_g"].astype(f32),
        "ln_emb_b": params["ln_emb_b"].astype(f32),
        "wqkv": wqkv.astype(bf16),
        "bqkv": bqkv.astype(f32),
        "wo": params["wo"].astype(bf16),
        "bo": params["bo"].astype(f32),
        "ln1_g": params["ln1_g"].astype(f32),
        "ln1_b": params["ln1_b"].astype(f32),
        "w1": params["w1"].astype(bf16),
        "b1": params["b1"].astype(f32),
        "w2": params["w2"].astype(bf16),
        "b2": params["b2"].astype(f32),
        "ln2_g": params["ln2_g"].astype(f32),
        "ln2_b": params["ln2_b"].astype(f32),
    }


# ----------------------------------- main -------------------------------------

if __name__ == "__main__":
    B, L, H = 2, 8, 32          # batch, seq_len, hidden_size
    NUM_LAYERS = 2              # args.num_hidden_layers
    NUM_HEADS = 2               # args.num_attention_heads
    MAX_LEN = 16                # args.max_seq_length
    NUM_ITEMS = 100

    key = jax.random.PRNGKey(0)
    k_seq, k_ids, k_par = jax.random.split(key, 3)

    seqs = jax.random.normal(k_seq, (B, L, H), dtype=jnp.float32)
    seqs_data = jax.random.randint(k_ids, (B, L), 0, NUM_ITEMS, dtype=jnp.int32)
    # NOTE: dropout layers run in eval mode (identity); training-time dropout
    # would need pltpu.prng_* which is out of scope for this forward pass.

    params = init_params(k_par, max_len=MAX_LEN, hidden=H, num_layers=NUM_LAYERS)
    prep = prepare_params(params, num_heads=NUM_HEADS)

    out = decoder_forward(seqs, seqs_data, prep,
                          num_layers=NUM_LAYERS, num_heads=NUM_HEADS)
    out = jax.block_until_ready(out)

    assert out.shape == (B, L, H), out.shape
    assert bool(jnp.all(jnp.isfinite(out)))
    print("KERNEL_OK")
</pallas_src>

<mosaic_0001>
module attributes {stable_mosaic.version = 11 : i64} {
  func.func @decoder_kernel(%arg0: i32, %arg1: memref<2x8x32xf32, #tpu.memory_space<vmem>>, %arg2: memref<2x1x8xi32, #tpu.memory_space<vmem>>, %arg3: memref<8x32xf32, #tpu.memory_space<vmem>>, %arg4: memref<1x32xf32, #tpu.memory_space<vmem>>, %arg5: memref<1x32xf32, #tpu.memory_space<vmem>>, %arg6: memref<2x32x96xbf16, #tpu.memory_space<vmem>>, %arg7: memref<2x1x96xf32, #tpu.memory_space<vmem>>, %arg8: memref<2x32x32xbf16, #tpu.memory_space<vmem>>, %arg9: memref<2x1x32xf32, #tpu.memory_space<vmem>>, %arg10: memref<2x1x32xf32, #tpu.memory_space<vmem>>, %arg11: memref<2x1x32xf32, #tpu.memory_space<vmem>>, %arg12: memref<2x32x128xbf16, #tpu.memory_space<vmem>>, %arg13: memref<2x1x128xf32, #tpu.memory_space<vmem>>, %arg14: memref<2x128x32xbf16, #tpu.memory_space<vmem>>, %arg15: memref<2x1x32xf32, #tpu.memory_space<vmem>>, %arg16: memref<2x1x32xf32, #tpu.memory_space<vmem>>, %arg17: memref<2x1x32xf32, #tpu.memory_space<vmem>>, %arg18: memref<2x8x32xf32, #tpu.memory_space<vmem>>) attributes {dimension_semantics = [#tpu.dimension_semantics<parallel>], iteration_bounds = array<i64: 1>, scalar_prefetch = 0 : i64, scratch_operands = 0 : i64, tpu.core_type = #tpu.core_type<tc>, window_params = [{transform_indices = @transform_0, window_bounds = array<i64: 2, 8, 32>}, {transform_indices = @transform_1, window_bounds = array<i64: 2, 1, 8>}, {pipeline_mode = #tpu.pipeline_mode<synchronous>, transform_indices = @transform_2, window_bounds = array<i64: 8, 32>}, {pipeline_mode = #tpu.pipeline_mode<synchronous>, transform_indices = @transform_3, window_bounds = array<i64: 1, 32>}, {pipeline_mode = #tpu.pipeline_mode<synchronous>, transform_indices = @transform_4, window_bounds = array<i64: 1, 32>}, {pipeline_mode = #tpu.pipeline_mode<synchronous>, transform_indices = @transform_5, window_bounds = array<i64: 2, 32, 96>}, {pipeline_mode = #tpu.pipeline_mode<synchronous>, transform_indices = @transform_6, window_bounds = array<i64: 2, 1, 96>}, {pipeline_mode = #tpu.pipeline_mode<synchronous>, transform_indices = @transform_7, window_bounds = array<i64: 2, 32, 32>}, {pipeline_mode = #tpu.pipeline_mode<synchronous>, transform_indices = @transform_8, window_bounds = array<i64: 2, 1, 32>}, {pipeline_mode = #tpu.pipeline_mode<synchronous>, transform_indices = @transform_9, window_bounds = array<i64: 2, 1, 32>}, {pipeline_mode = #tpu.pipeline_mode<synchronous>, transform_indices = @transform_10, window_bounds = array<i64: 2, 1, 32>}, {pipeline_mode = #tpu.pipeline_mode<synchronous>, transform_indices = @transform_11, window_bounds = array<i64: 2, 32, 128>}, {pipeline_mode = #tpu.pipeline_mode<synchronous>, transform_indices = @transform_12, window_bounds = array<i64: 2, 1, 128>}, {pipeline_mode = #tpu.pipeline_mode<synchronous>, transform_indices = @transform_13, window_bounds = array<i64: 2, 128, 32>}, {pipeline_mode = #tpu.pipeline_mode<synchronous>, transform_indices = @transform_14, window_bounds = array<i64: 2, 1, 32>}, {pipeline_mode = #tpu.pipeline_mode<synchronous>, transform_indices = @transform_15, window_bounds = array<i64: 2, 1, 32>}, {pipeline_mode = #tpu.pipeline_mode<synchronous>, transform_indices = @transform_16, window_bounds = array<i64: 2, 1, 32>}, {transform_indices = @transform_17, window_bounds = array<i64: 2, 8, 32>}]} {
    %0 = tpu.iota {dimensions = array<i32: 0>} : vector<8x8xi32>
    %1 = tpu.iota {dimensions = array<i32: 1>} : vector<8x8xi32>
    %2 = arith.cmpi sle, %1, %0 : vector<8x8xi32>
    %c0 = arith.constant 0 : index
    %c0_0 = arith.constant 0 : index
    %c0_1 = arith.constant 0 : index
    %3 = vector.load %arg2[%c0, %c0_0, %c0_1] : memref<2x1x8xi32, #tpu.memory_space<vmem>>, vector<1x1x8xi32>
    %4 = vector.shape_cast %3 : vector<1x1x8xi32> to vector<1x8xi32>
    %c0_i32 = arith.constant 0 : i32
    %5 = vector.broadcast %c0_i32 : i32 to vector<1x8xi32>
    %6 = arith.cmpi sgt, %4, %5 : vector<1x8xi32>
    %7 = vector.broadcast %6 : vector<1x8xi1> to vector<8x8xi1>
    %8 = arith.andi %7, %2 : vector<8x8xi1>
    %cst = arith.constant 0.000000e+00 : f32
    %cst_2 = arith.constant -1.000000e+04 : f32
    %9 = vector.broadcast %cst : f32 to vector<8x8xf32>
    %10 = vector.broadcast %cst_2 : f32 to vector<8x8xf32>
    %11 = arith.select %8, %9, %10 : vector<8x8xi1>, vector<8x8xf32>
    %12 = vector.shape_cast %11 : vector<8x8xf32> to vector<1x8x8xf32>
    %c1 = arith.constant 1 : index
    %c0_3 = arith.constant 0 : index
    %c0_4 = arith.constant 0 : index
    %13 = vector.load %arg2[%c1, %c0_3, %c0_4] : memref<2x1x8xi32, #tpu.memory_space<vmem>>, vector<1x1x8xi32>
    %14 = vector.shape_cast %13 : vector<1x1x8xi32> to vector<1x8xi32>
    %c0_i32_5 = arith.constant 0 : i32
    %15 = vector.broadcast %c0_i32_5 : i32 to vector<1x8xi32>
    %16 = arith.cmpi sgt, %14, %15 : vector<1x8xi32>
    %17 = vector.broadcast %16 : vector<1x8xi1> to vector<8x8xi1>
    %18 = arith.andi %17, %2 : vector<8x8xi1>
    %cst_6 = arith.constant 0.000000e+00 : f32
    %cst_7 = arith.constant -1.000000e+04 : f32
    %19 = vector.broadcast %cst_6 : f32 to vector<8x8xf32>
    %20 = vector.broadcast %cst_7 : f32 to vector<8x8xf32>
    %21 = arith.select %18, %19, %20 : vector<8x8xi1>, vector<8x8xf32>
    %22 = vector.shape_cast %21 : vector<8x8xf32> to vector<1x8x8xf32>
    %c0_8 = arith.constant 0 : index
    %c0_9 = arith.constant 0 : index
    %c0_10 = arith.constant 0 : index
    %23 = vector.load %arg1[%c0_8, %c0_9, %c0_10] : memref<2x8x32xf32, #tpu.memory_space<vmem>>, vector<2x8x32xf32>
    %c0_11 = arith.constant 0 : index
    %c0_12 = arith.constant 0 : index
    %24 = vector.load %arg3[%c0_11, %c0_12] : memref<8x32xf32, #tpu.memory_space<vmem>>, vector<8x32xf32>
    %25 = vector.shape_cast %24 : vector<8x32xf32> to vector<1x8x32xf32>
    %26 = vector.broadcast %25 : vector<1x8x32xf32> to vector<2x8x32xf32>
    %27 = arith.addf %23, %26 : vector<2x8x32xf32>
    %c0_13 = arith.constant 0 : index
    %c0_14 = arith.constant 0 : index
    %28 = vector.load %arg4[%c0_13, %c0_14] : memref<1x32xf32, #tpu.memory_space<vmem>>, vector<1x32xf32>
    %c0_15 = arith.constant 0 : index
    %c0_16 = arith.constant 0 : index
    %29 = vector.load %arg5[%c0_15, %c0_16] : memref<1x32xf32, #tpu.memory_space<vmem>>, vector<1x32xf32>
    %cst_17 = arith.constant dense<0.000000e+00> : vector<2x8xf32>
    %30 = vector.multi_reduction <add>, %27, %cst_17 [2] : vector<2x8x32xf32> to vector<2x8xf32>
    %31 = vector.shape_cast %30 : vector<2x8xf32> to vector<2x8x1xf32>
    %cst_18 = arith.constant 3.200000e+01 : f32
    %32 = vector.broadcast %cst_18 : f32 to vector<2x8x1xf32>
    %33 = arith.divf %31, %32 : vector<2x8x1xf32>
    %34 = vector.broadcast %33 : vector<2x8x1xf32> to vector<2x8x32xf32>
    %35 = arith.subf %27, %34 : vector<2x8x32xf32>
    %36 = arith.mulf %35, %35 : vector<2x8x32xf32>
    %cst_19 = arith.constant dense<0.000000e+00> : vector<2x8xf32>
    %37 = vector.multi_reduction <add>, %36, %cst_19 [2] : vector<2x8x32xf32> to vector<2x8xf32>
    %38 = vector.shape_cast %37 : vector<2x8xf32> to vector<2x8x1xf32>
    %cst_20 = arith.constant 3.200000e+01 : f32
    %39 = vector.broadcast %cst_20 : f32 to vector<2x8x1xf32>
    %40 = arith.divf %38, %39 : vector<2x8x1xf32>
    %cst_21 = arith.constant 9.99999996E-13 : f32
    %41 = vector.broadcast %cst_21 : f32 to vector<2x8x1xf32>
    %42 = arith.addf %40, %41 : vector<2x8x1xf32>
    %43 = math.rsqrt %42 : vector<2x8x1xf32>
    %44 = vector.broadcast %43 : vector<2x8x1xf32> to vector<2x8x32xf32>
    %45 = arith.mulf %35, %44 : vector<2x8x32xf32>
    %46 = vector.shape_cast %28 : vector<1x32xf32> to vector<1x1x32xf32>
    %47 = vector.broadcast %46 : vector<1x1x32xf32> to vector<2x8x32xf32>
    %48 = arith.mulf %47, %45 : vector<2x8x32xf32>
    %49 = vector.shape_cast %29 : vector<1x32xf32> to vector<1x1x32xf32>
    %50 = vector.broadcast %49 : vector<1x1x32xf32> to vector<2x8x32xf32>
    %51 = arith.addf %48, %50 : vector<2x8x32xf32>
    %52 = vector.shape_cast %51 : vector<2x8x32xf32> to vector<16x32xf32>
    %c0_i32_22 = arith.constant 0 : i32
    %53 = arith.truncf %52 : vector<16x32xf32> to vector<16x32xbf16>
    %54 = arith.index_cast %c0_i32_22 : i32 to index
    %c0_23 = arith.constant 0 : index
    %c0_24 = arith.constant 0 : index
    %55 = vector.load %arg6[%54, %c0_23, %c0_24] : memref<2x32x96xbf16, #tpu.memory_space<vmem>>, vector<1x32x96xbf16>
    %56 = vector.shape_cast %55 : vector<1x32x96xbf16> to vector<32x96xbf16>
    %cst_25 = arith.constant dense<0.000000e+00> : vector<16x96xf32>
    %57 = tpu.matmul %53, %56, %cst_25 {dimension_numbers = #tpu.dot_dimension_numbers<[1], [0], [0], [1], [0, 0, 1, 1], [], []>} : vector<16x32xbf16>, vector<32x96xbf16>, vector<16x96xf32> -> vector<16x96xf32>
    %58 = arith.index_cast %c0_i32_22 : i32 to index
    %c0_26 = arith.constant 0 : index
    %c0_27 = arith.constant 0 : index
    %59 = vector.load %arg7[%58, %c0_26, %c0_27] : memref<2x1x96xf32, #tpu.memory_space<vmem>>, vector<1x1x96xf32>
    %60 = vector.shape_cast %59 : vector<1x1x96xf32> to vector<1x96xf32>
    %61 = vector.broadcast %60 : vector<1x96xf32> to vector<16x96xf32>
    %62 = arith.addf %57, %61 : vector<16x96xf32>
    %63 = vector.shape_cast %62 : vector<16x96xf32> to vector<2x8x96xf32>
    %64 = vector.extract_strided_slice %63 {offsets = [0, 0, 0], sizes = [1, 8, 96], strides = [1, 1, 1]} : vector<2x8x96xf32> to vector<1x8x96xf32>
    %65 = vector.shape_cast %64 : vector<1x8x96xf32> to vector<8x96xf32>
    %66 = vector.extract_strided_slice %65 {offsets = [0, 0], sizes = [8, 16], strides = [1, 1]} : vector<8x96xf32> to vector<8x16xf32>
    %67 = vector.extract_strided_slice %65 {offsets = [0, 16], sizes = [8, 16], strides = [1, 1]} : vector<8x96xf32> to vector<8x16xf32>
    %68 = vector.shape_cast %66 : vector<8x16xf32> to vector<1x8x16xf32>
    %69 = vector.shape_cast %67 : vector<8x16xf32> to vector<1x8x16xf32>
    %70 = tpu.concatenate %68, %69 in 0 : vector<1x8x16xf32>, vector<1x8x16xf32> -> vector<2x8x16xf32>
    %71 = vector.extract_strided_slice %65 {offsets = [0, 32], sizes = [8, 16], strides = [1, 1]} : vector<8x96xf32> to vector<8x16xf32>
    %72 = vector.extract_strided_slice %65 {offsets = [0, 48], sizes = [8, 16], strides = [1, 1]} : vector<8x96xf32> to vector<8x16xf32>
    %73 = vector.shape_cast %71 : vector<8x16xf32> to vector<1x8x16xf32>
    %74 = vector.shape_cast %72 : vector<8x16xf32> to vector<1x8x16xf32>
    %75 = tpu.concatenate %73, %74 in 0 : vector<1x8x16xf32>, vector<1x8x16xf32> -> vector<2x8x16xf32>
    %76 = vector.extract_strided_slice %65 {offsets = [0, 64], sizes = [8, 16], strides = [1, 1]} : vector<8x96xf32> to vector<8x16xf32>
    %77 = vector.extract_strided_slice %65 {offsets = [0, 80], sizes = [8, 16], strides = [1, 1]} : vector<8x96xf32> to vector<8x16xf32>
    %78 = vector.shape_cast %76 : vector<8x16xf32> to vector<1x8x16xf32>
    %79 = vector.shape_cast %77 : vector<8x16xf32> to vector<1x8x16xf32>
    %80 = tpu.concatenate %78, %79 in 0 : vector<1x8x16xf32>, vector<1x8x16xf32> -> vector<2x8x16xf32>
    %81 = arith.truncf %70 : vector<2x8x16xf32> to vector<2x8x16xbf16>
    %82 = arith.truncf %75 : vector<2x8x16xf32> to vector<2x8x16xbf16>
    "tpu.trace_start"() <{level = 10 : i32, message = "hqe,hke->hqk"}> : () -> ()
    %cst_28 = arith.constant dense<0.000000e+00> : vector<2x8x8xf32>
    %83 = tpu.matmul %81, %82, %cst_28 {dimension_numbers = #tpu.dot_dimension_numbers<[2], [2], [1], [1], [0, 0, 0, 1, 1, 1], [0], [0]>} : vector<2x8x16xbf16>, vector<2x8x16xbf16>, vector<2x8x8xf32> -> vector<2x8x8xf32>
    "tpu.trace_stop"() : () -> ()
    %84 = vector.broadcast %12 : vector<1x8x8xf32> to vector<2x8x8xf32>
    %85 = arith.addf %83, %84 : vector<2x8x8xf32>
    %cst_29 = arith.constant dense<0xFF800000> : vector<2x8xf32>
    %86 = vector.multi_reduction <maximumf>, %85, %cst_29 [2] : vector<2x8x8xf32> to vector<2x8xf32>
    %87 = vector.shape_cast %86 : vector<2x8xf32> to vector<2x8x1xf32>
    %88 = vector.broadcast %87 : vector<2x8x1xf32> to vector<2x8x8xf32>
    %89 = arith.subf %85, %88 : vector<2x8x8xf32>
    %90 = math.exp %89 : vector<2x8x8xf32>
    %cst_30 = arith.constant dense<0.000000e+00> : vector<2x8xf32>
    %91 = vector.multi_reduction <add>, %90, %cst_30 [2] : vector<2x8x8xf32> to vector<2x8xf32>
    %92 = vector.shape_cast %91 : vector<2x8xf32> to vector<2x8x1xf32>
    %93 = tpu.reciprocal %92 {approx = true} : vector<2x8x1xf32> -> vector<2x8x1xf32>
    %94 = vector.broadcast %93 : vector<2x8x1xf32> to vector<2x8x8xf32>
    %95 = arith.mulf %90, %94 : vector<2x8x8xf32>
    %96 = arith.truncf %95 : vector<2x8x8xf32> to vector<2x8x8xbf16>
    %97 = arith.truncf %80 : vector<2x8x16xf32> to vector<2x8x16xbf16>
    "tpu.trace_start"() <{level = 10 : i32, message = "hqk,hke->hqe"}> : () -> ()
    %cst_31 = arith.constant dense<0.000000e+00> : vector<2x8x16xf32>
    %98 = tpu.matmul %96, %97, %cst_31 {dimension_numbers = #tpu.dot_dimension_numbers<[2], [1], [1], [2], [0, 0, 0, 1, 1, 2], [0], [0]>} : vector<2x8x8xbf16>, vector<2x8x16xbf16>, vector<2x8x16xf32> -> vector<2x8x16xf32>
    "tpu.trace_stop"() : () -> ()
    %99 = vector.extract_strided_slice %98 {offsets = [0, 0, 0], sizes = [1, 8, 16], strides = [1, 1, 1]} : vector<2x8x16xf32> to vector<1x8x16xf32>
    %100 = vector.shape_cast %99 : vector<1x8x16xf32> to vector<8x16xf32>
    %101 = vector.extract_strided_slice %98 {offsets = [1, 0, 0], sizes = [1, 8, 16], strides = [1, 1, 1]} : vector<2x8x16xf32> to vector<1x8x16xf32>
    %102 = vector.shape_cast %101 : vector<1x8x16xf32> to vector<8x16xf32>
    %103 = tpu.concatenate %100, %102 in 1 : vector<8x16xf32>, vector<8x16xf32> -> vector<8x32xf32>
    %104 = vector.extract_strided_slice %63 {offsets = [1, 0, 0], sizes = [1, 8, 96], strides = [1, 1, 1]} : vector<2x8x96xf32> to vector<1x8x96xf32>
    %105 = vector.shape_cast %104 : vector<1x8x96xf32> to vector<8x96xf32>
    %106 = vector.extract_strided_slice %105 {offsets = [0, 0], sizes = [8, 16], strides = [1, 1]} : vector<8x96xf32> to vector<8x16xf32>
    %107 = vector.extract_strided_slice %105 {offsets = [0, 16], sizes = [8, 16], strides = [1, 1]} : vector<8x96xf32> to vector<8x16xf32>
    %108 = vector.shape_cast %106 : vector<8x16xf32> to vector<1x8x16xf32>
    %109 = vector.shape_cast %107 : vector<8x16xf32> to vector<1x8x16xf32>
    %110 = tpu.concatenate %108, %109 in 0 : vector<1x8x16xf32>, vector<1x8x16xf32> -> vector<2x8x16xf32>
    %111 = vector.extract_strided_slice %105 {offsets = [0, 32], sizes = [8, 16], strides = [1, 1]} : vector<8x96xf32> to vector<8x16xf32>
    %112 = vector.extract_strided_slice %105 {offsets = [0, 48], sizes = [8, 16], strides = [1, 1]} : vector<8x96xf32> to vector<8x16xf32>
    %113 = vector.shape_cast %111 : vector<8x16xf32> to vector<1x8x16xf32>
    %114 = vector.shape_cast %112 : vector<8x16xf32> to vector<1x8x16xf32>
    %115 = tpu.concatenate %113, %114 in 0 : vector<1x8x16xf32>, vector<1x8x16xf32> -> vector<2x8x16xf32>
    %116 = vector.extract_strided_slice %105 {offsets = [0, 64], sizes = [8, 16], strides = [1, 1]} : vector<8x96xf32> to vector<8x16xf32>
    %117 = vector.extract_strided_slice %105 {offsets = [0, 80], sizes = [8, 16], strides = [1, 1]} : vector<8x96xf32> to vector<8x16xf32>
    %118 = vector.shape_cast %116 : vector<8x16xf32> to vector<1x8x16xf32>
    %119 = vector.shape_cast %117 : vector<8x16xf32> to vector<1x8x16xf32>
    %120 = tpu.concatenate %118, %119 in 0 : vector<1x8x16xf32>, vector<1x8x16xf32> -> vector<2x8x16xf32>
    %121 = arith.truncf %110 : vector<2x8x16xf32> to vector<2x8x16xbf16>
    %122 = arith.truncf %115 : vector<2x8x16xf32> to vector<2x8x16xbf16>
    "tpu.trace_start"() <{level = 10 : i32, message = "hqe,hke->hqk"}> : () -> ()
    %cst_32 = arith.constant dense<0.000000e+00> : vector<2x8x8xf32>
    %123 = tpu.matmul %121, %122, %cst_32 {dimension_numbers = #tpu.dot_dimension_numbers<[2], [2], [1], [1], [0, 0, 0, 1, 1, 1], [0], [0]>} : vector<2x8x16xbf16>, vector<2x8x16xbf16>, vector<2x8x8xf32> -> vector<2x8x8xf32>
    "tpu.trace_stop"() : () -> ()
    %124 = vector.broadcast %22 : vector<1x8x8xf32> to vector<2x8x8xf32>
    %125 = arith.addf %123, %124 : vector<2x8x8xf32>
    %cst_33 = arith.constant dense<0xFF800000> : vector<2x8xf32>
    %126 = vector.multi_reduction <maximumf>, %125, %cst_33 [2] : vector<2x8x8xf32> to vector<2x8xf32>
    %127 = vector.shape_cast %126 : vector<2x8xf32> to vector<2x8x1xf32>
    %128 = vector.broadcast %127 : vector<2x8x1xf32> to vector<2x8x8xf32>
    %129 = arith.subf %125, %128 : vector<2x8x8xf32>
    %130 = math.exp %129 : vector<2x8x8xf32>
    %cst_34 = arith.constant dense<0.000000e+00> : vector<2x8xf32>
    %131 = vector.multi_reduction <add>, %130, %cst_34 [2] : vector<2x8x8xf32> to vector<2x8xf32>
    %132 = vector.shape_cast %131 : vector<2x8xf32> to vector<2x8x1xf32>
    %133 = tpu.reciprocal %132 {approx = true} : vector<2x8x1xf32> -> vector<2x8x1xf32>
    %134 = vector.broadcast %133 : vector<2x8x1xf32> to vector<2x8x8xf32>
    %135 = arith.mulf %130, %134 : vector<2x8x8xf32>
    %136 = arith.truncf %135 : vector<2x8x8xf32> to vector<2x8x8xbf16>
    %137 = arith.truncf %120 : vector<2x8x16xf32> to vector<2x8x16xbf16>
    "tpu.trace_start"() <{level = 10 : i32, message = "hqk,hke->hqe"}> : () -> ()
    %cst_35 = arith.constant dense<0.000000e+00> : vector<2x8x16xf32>
    %138 = tpu.matmul %136, %137, %cst_35 {dimension_numbers = #tpu.dot_dimension_numbers<[2], [1], [1], [2], [0, 0, 0, 1, 1, 2], [0], [0]>} : vector<2x8x8xbf16>, vector<2x8x16xbf16>, vector<2x8x16xf32> -> vector<2x8x16xf32>
    "tpu.trace_stop"() : () -> ()
    %139 = vector.extract_strided_slice %138 {offsets = [0, 0, 0], sizes = [1, 8, 16], strides = [1, 1, 1]} : vector<2x8x16xf32> to vector<1x8x16xf32>
    %140 = vector.shape_cast %139 : vector<1x8x16xf32> to vector<8x16xf32>
    %141 = vector.extract_strided_slice %138 {offsets = [1, 0, 0], sizes = [1, 8, 16], strides = [1, 1, 1]} : vector<2x8x16xf32> to vector<1x8x16xf32>
    %142 = vector.shape_cast %141 : vector<1x8x16xf32> to vector<8x16xf32>
    %143 = tpu.concatenate %140, %142 in 1 : vector<8x16xf32>, vector<8x16xf32> -> vector<8x32xf32>
    %144 = tpu.concatenate %103, %143 in 0 : vector<8x32xf32>, vector<8x32xf32> -> vector<16x32xf32>
    %145 = arith.truncf %144 : vector<16x32xf32> to vector<16x32xbf16>
    %146 = arith.index_cast %c0_i32_22 : i32 to index
    %c0_36 = arith.constant 0 : index
    %c0_37 = arith.constant 0 : index
    %147 = vector.load %arg8[%146, %c0_36, %c0_37] : memref<2x32x32xbf16, #tpu.memory_space<vmem>>, vector<1x32x32xbf16>
    %148 = vector.shape_cast %147 : vector<1x32x32xbf16> to vector<32x32xbf16>
    %cst_38 = arith.constant dense<0.000000e+00> : vector<16x32xf32>
    %149 = tpu.matmul %145, %148, %cst_38 {dimension_numbers = #tpu.dot_dimension_numbers<[1], [0], [0], [1], [0, 0, 1, 1], [], []>} : vector<16x32xbf16>, vector<32x32xbf16>, vector<16x32xf32> -> vector<16x32xf32>
    %150 = arith.index_cast %c0_i32_22 : i32 to index
    %c0_39 = arith.constant 0 : index
    %c0_40 = arith.constant 0 : index
    %151 = vector.load %arg9[%150, %c0_39, %c0_40] : memref<2x1x32xf32, #tpu.memory_space<vmem>>, vector<1x1x32xf32>
    %152 = vector.shape_cast %151 : vector<1x1x32xf32> to vector<1x32xf32>
    %153 = vector.broadcast %152 : vector<1x32xf32> to vector<16x32xf32>
    %154 = arith.addf %149, %153 : vector<16x32xf32>
    %155 = arith.addf %154, %52 : vector<16x32xf32>
    %156 = arith.index_cast %c0_i32_22 : i32 to index
    %c0_41 = arith.constant 0 : index
    %c0_42 = arith.constant 0 : index
    %157 = vector.load %arg10[%156, %c0_41, %c0_42] : memref<2x1x32xf32, #tpu.memory_space<vmem>>, vector<1x1x32xf32>
    %158 = vector.shape_cast %157 : vector<1x1x32xf32> to vector<1x32xf32>
    %159 = arith.index_cast %c0_i32_22 : i32 to index
    %c0_43 = arith.constant 0 : index
    %c0_44 = arith.constant 0 : index
    %160 = vector.load %arg11[%159, %c0_43, %c0_44] : memref<2x1x32xf32, #tpu.memory_space<vmem>>, vector<1x1x32xf32>
    %161 = vector.shape_cast %160 : vector<1x1x32xf32> to vector<1x32xf32>
    %cst_45 = arith.constant dense<0.000000e+00> : vector<16xf32>
    %162 = vector.multi_reduction <add>, %155, %cst_45 [1] : vector<16x32xf32> to vector<16xf32>
    %163 = vector.shape_cast %162 : vector<16xf32> to vector<16x1xf32>
    %cst_46 = arith.constant 3.200000e+01 : f32
    %164 = vector.broadcast %cst_46 : f32 to vector<16x1xf32>
    %165 = arith.divf %163, %164 : vector<16x1xf32>
    %166 = vector.broadcast %165 : vector<16x1xf32> to vector<16x32xf32>
    %167 = arith.subf %155, %166 : vector<16x32xf32>
    %168 = arith.mulf %167, %167 : vector<16x32xf32>
    %cst_47 = arith.constant dense<0.000000e+00> : vector<16xf32>
    %169 = vector.multi_reduction <add>, %168, %cst_47 [1] : vector<16x32xf32> to vector<16xf32>
    %170 = vector.shape_cast %169 : vector<16xf32> to vector<16x1xf32>
    %cst_48 = arith.constant 3.200000e+01 : f32
    %171 = vector.broadcast %cst_48 : f32 to vector<16x1xf32>
    %172 = arith.divf %170, %171 : vector<16x1xf32>
    %cst_49 = arith.constant 9.99999996E-13 : f32
    %173 = vector.broadcast %cst_49 : f32 to vector<16x1xf32>
    %174 = arith.addf %172, %173 : vector<16x1xf32>
    %175 = math.rsqrt %174 : vector<16x1xf32>
    %176 = vector.broadcast %175 : vector<16x1xf32> to vector<16x32xf32>
    %177 = arith.mulf %167, %176 : vector<16x32xf32>
    %178 = vector.broadcast %158 : vector<1x32xf32> to vector<16x32xf32>
    %179 = arith.mulf %178, %177 : vector<16x32xf32>
    %180 = vector.broadcast %161 : vector<1x32xf32> to vector<16x32xf32>
    %181 = arith.addf %179, %180 : vector<16x32xf32>
    %182 = arith.truncf %181 : vector<16x32xf32> to vector<16x32xbf16>
    %183 = arith.index_cast %c0_i32_22 : i32 to index
    %c0_50 = arith.constant 0 : index
    %c0_51 = arith.constant 0 : index
    %184 = vector.load %arg12[%183, %c0_50, %c0_51] : memref<2x32x128xbf16, #tpu.memory_space<vmem>>, vector<1x32x128xbf16>
    %185 = vector.shape_cast %184 : vector<1x32x128xbf16> to vector<32x128xbf16>
    %cst_52 = arith.constant dense<0.000000e+00> : vector<16x128xf32>
    %186 = tpu.matmul %182, %185, %cst_52 {dimension_numbers = #tpu.dot_dimension_numbers<[1], [0], [0], [1], [0, 0, 1, 1], [], []>} : vector<16x32xbf16>, vector<32x128xbf16>, vector<16x128xf32> -> vector<16x128xf32>
    %187 = arith.index_cast %c0_i32_22 : i32 to index
    %c0_53 = arith.constant 0 : index
    %c0_54 = arith.constant 0 : index
    %188 = vector.load %arg13[%187, %c0_53, %c0_54] : memref<2x1x128xf32, #tpu.memory_space<vmem>>, vector<1x1x128xf32>
    %189 = vector.shape_cast %188 : vector<1x1x128xf32> to vector<1x128xf32>
    %190 = vector.broadcast %189 : vector<1x128xf32> to vector<16x128xf32>
    %191 = arith.addf %186, %190 : vector<16x128xf32>
    %cst_55 = arith.constant 5.000000e-01 : f32
    %192 = vector.broadcast %cst_55 : f32 to vector<16x128xf32>
    %193 = arith.mulf %191, %192 : vector<16x128xf32>
    %cst_56 = arith.constant 1.41421354 : f32
    %194 = vector.broadcast %cst_56 : f32 to vector<16x128xf32>
    %195 = arith.divf %191, %194 : vector<16x128xf32>
    %196 = math.erf %195 : vector<16x128xf32>
    %cst_57 = arith.constant 1.000000e+00 : f32
    %197 = vector.broadcast %cst_57 : f32 to vector<16x128xf32>
    %198 = arith.addf %197, %196 : vector<16x128xf32>
    %199 = arith.mulf %193, %198 : vector<16x128xf32>
    %200 = arith.truncf %199 : vector<16x128xf32> to vector<16x128xbf16>
    %201 = arith.index_cast %c0_i32_22 : i32 to index
    %c0_58 = arith.constant 0 : index
    %c0_59 = arith.constant 0 : index
    %202 = vector.load %arg14[%201, %c0_58, %c0_59] : memref<2x128x32xbf16, #tpu.memory_space<vmem>>, vector<1x128x32xbf16>
    %203 = vector.shape_cast %202 : vector<1x128x32xbf16> to vector<128x32xbf16>
    %cst_60 = arith.constant dense<0.000000e+00> : vector<16x32xf32>
    %204 = tpu.matmul %200, %203, %cst_60 {dimension_numbers = #tpu.dot_dimension_numbers<[1], [0], [0], [1], [0, 0, 1, 1], [], []>} : vector<16x128xbf16>, vector<128x32xbf16>, vector<16x32xf32> -> vector<16x32xf32>
    %205 = arith.index_cast %c0_i32_22 : i32 to index
    %c0_61 = arith.constant 0 : index
    %c0_62 = arith.constant 0 : index
    %206 = vector.load %arg15[%205, %c0_61, %c0_62] : memref<2x1x32xf32, #tpu.memory_space<vmem>>, vector<1x1x32xf32>
    %207 = vector.shape_cast %206 : vector<1x1x32xf32> to vector<1x32xf32>
    %208 = vector.broadcast %207 : vector<1x32xf32> to vector<16x32xf32>
    %209 = arith.addf %204, %208 : vector<16x32xf32>
    %210 = arith.addf %209, %181 : vector<16x32xf32>
    %211 = arith.index_cast %c0_i32_22 : i32 to index
    %c0_63 = arith.constant 0 : index
    %c0_64 = arith.constant 0 : index
    %212 = vector.load %arg16[%211, %c0_63, %c0_64] : memref<2x1x32xf32, #tpu.memory_space<vmem>>, vector<1x1x32xf32>
    %213 = vector.shape_cast %212 : vector<1x1x32xf32> to vector<1x32xf32>
    %214 = arith.index_cast %c0_i32_22 : i32 to index
    %c0_65 = arith.constant 0 : index
    %c0_66 = arith.constant 0 : index
    %215 = vector.load %arg17[%214, %c0_65, %c0_66] : memref<2x1x32xf32, #tpu.memory_space<vmem>>, vector<1x1x32xf32>
    %216 = vector.shape_cast %215 : vector<1x1x32xf32> to vector<1x32xf32>
    %cst_67 = arith.constant dense<0.000000e+00> : vector<16xf32>
    %217 = vector.multi_reduction <add>, %210, %cst_67 [1] : vector<16x32xf32> to vector<16xf32>
    %218 = vector.shape_cast %217 : vector<16xf32> to vector<16x1xf32>
    %cst_68 = arith.constant 3.200000e+01 : f32
    %219 = vector.broadcast %cst_68 : f32 to vector<16x1xf32>
    %220 = arith.divf %218, %219 : vector<16x1xf32>
    %221 = vector.broadcast %220 : vector<16x1xf32> to vector<16x32xf32>
    %222 = arith.subf %210, %221 : vector<16x32xf32>
    %223 = arith.mulf %222, %222 : vector<16x32xf32>
    %cst_69 = arith.constant dense<0.000000e+00> : vector<16xf32>
    %224 = vector.multi_reduction <add>, %223, %cst_69 [1] : vector<16x32xf32> to vector<16xf32>
    %225 = vector.shape_cast %224 : vector<16xf32> to vector<16x1xf32>
    %cst_70 = arith.constant 3.200000e+01 : f32
    %226 = vector.broadcast %cst_70 : f32 to vector<16x1xf32>
    %227 = arith.divf %225, %226 : vector<16x1xf32>
    %cst_71 = arith.constant 9.99999996E-13 : f32
    %228 = vector.broadcast %cst_71 : f32 to vector<16x1xf32>
    %229 = arith.addf %227, %228 : vector<16x1xf32>
    %230 = math.rsqrt %229 : vector<16x1xf32>
    %231 = vector.broadcast %230 : vector<16x1xf32> to vector<16x32xf32>
    %232 = arith.mulf %222, %231 : vector<16x32xf32>
    %233 = vector.broadcast %213 : vector<1x32xf32> to vector<16x32xf32>
    %234 = arith.mulf %233, %232 : vector<16x32xf32>
    %235 = vector.broadcast %216 : vector<1x32xf32> to vector<16x32xf32>
    %236 = arith.addf %234, %235 : vector<16x32xf32>
    %c1_i32 = arith.constant 1 : i32
    %237 = arith.truncf %236 : vector<16x32xf32> to vector<16x32xbf16>
    %238 = arith.index_cast %c1_i32 : i32 to index
    %c0_72 = arith.constant 0 : index
    %c0_73 = arith.constant 0 : index
    %239 = vector.load %arg6[%238, %c0_72, %c0_73] : memref<2x32x96xbf16, #tpu.memory_space<vmem>>, vector<1x32x96xbf16>
    %240 = vector.shape_cast %239 : vector<1x32x96xbf16> to vector<32x96xbf16>
    %cst_74 = arith.constant dense<0.000000e+00> : vector<16x96xf32>
    %241 = tpu.matmul %237, %240, %cst_74 {dimension_numbers = #tpu.dot_dimension_numbers<[1], [0], [0], [1], [0, 0, 1, 1], [], []>} : vector<16x32xbf16>, vector<32x96xbf16>, vector<16x96xf32> -> vector<16x96xf32>
    %242 = arith.index_cast %c1_i32 : i32 to index
    %c0_75 = arith.constant 0 : index
    %c0_76 = arith.constant 0 : index
    %243 = vector.load %arg7[%242, %c0_75, %c0_76] : memref<2x1x96xf32, #tpu.memory_space<vmem>>, vector<1x1x96xf32>
    %244 = vector.shape_cast %243 : vector<1x1x96xf32> to vector<1x96xf32>
    %245 = vector.broadcast %244 : vector<1x96xf32> to vector<16x96xf32>
    %246 = arith.addf %241, %245 : vector<16x96xf32>
    %247 = vector.shape_cast %246 : vector<16x96xf32> to vector<2x8x96xf32>
    %248 = vector.extract_strided_slice %247 {offsets = [0, 0, 0], sizes = [1, 8, 96], strides = [1, 1, 1]} : vector<2x8x96xf32> to vector<1x8x96xf32>
    %249 = vector.shape_cast %248 : vector<1x8x96xf32> to vector<8x96xf32>
    %250 = vector.extract_strided_slice %249 {offsets = [0, 0], sizes = [8, 16], strides = [1, 1]} : vector<8x96xf32> to vector<8x16xf32>
    %251 = vector.extract_strided_slice %249 {offsets = [0, 16], sizes = [8, 16], strides = [1, 1]} : vector<8x96xf32> to vector<8x16xf32>
    %252 = vector.shape_cast %250 : vector<8x16xf32> to vector<1x8x16xf32>
    %253 = vector.shape_cast %251 : vector<8x16xf32> to vector<1x8x16xf32>
    %254 = tpu.concatenate %252, %253 in 0 : vector<1x8x16xf32>, vector<1x8x16xf32> -> vector<2x8x16xf32>
    %255 = vector.extract_strided_slice %249 {offsets = [0, 32], sizes = [8, 16], strides = [1, 1]} : vector<8x96xf32> to vector<8x16xf32>
    %256 = vector.extract_strided_slice %249 {offsets = [0, 48], sizes = [8, 16], strides = [1, 1]} : vector<8x96xf32> to vector<8x16xf32>
    %257 = vector.shape_cast %255 : vector<8x16xf32> to vector<1x8x16xf32>
    %258 = vector.shape_cast %256 : vector<8x16xf32> to vector<1x8x16xf32>
    %259 = tpu.concatenate %257, %258 in 0 : vector<1x8x16xf32>, vector<1x8x16xf32> -> vector<2x8x16xf32>
    %260 = vector.extract_strided_slice %249 {offsets = [0, 64], sizes = [8, 16], strides = [1, 1]} : vector<8x96xf32> to vector<8x16xf32>
    %261 = vector.extract_strided_slice %249 {offsets = [0, 80], sizes = [8, 16], strides = [1, 1]} : vector<8x96xf32> to vector<8x16xf32>
    %262 = vector.shape_cast %260 : vector<8x16xf32> to vector<1x8x16xf32>
    %263 = vector.shape_cast %261 : vector<8x16xf32> to vector<1x8x16xf32>
    %264 = tpu.concatenate %262, %263 in 0 : vector<1x8x16xf32>, vector<1x8x16xf32> -> vector<2x8x16xf32>
    %265 = arith.truncf %254 : vector<2x8x16xf32> to vector<2x8x16xbf16>
    %266 = arith.truncf %259 : vector<2x8x16xf32> to vector<2x8x16xbf16>
    "tpu.trace_start"() <{level = 10 : i32, message = "hqe,hke->hqk"}> : () -> ()
    %cst_77 = arith.constant dense<0.000000e+00> : vector<2x8x8xf32>
    %267 = tpu.matmul %265, %266, %cst_77 {dimension_numbers = #tpu.dot_dimension_numbers<[2], [2], [1], [1], [0, 0, 0, 1, 1, 1], [0], [0]>} : vector<2x8x16xbf16>, vector<2x8x16xbf16>, vector<2x8x8xf32> -> vector<2x8x8xf32>
    "tpu.trace_stop"() : () -> ()
    %268 = vector.broadcast %12 : vector<1x8x8xf32> to vector<2x8x8xf32>
    %269 = arith.addf %267, %268 : vector<2x8x8xf32>
    %cst_78 = arith.constant dense<0xFF800000> : vector<2x8xf32>
    %270 = vector.multi_reduction <maximumf>, %269, %cst_78 [2] : vector<2x8x8xf32> to vector<2x8xf32>
    %271 = vector.shape_cast %270 : vector<2x8xf32> to vector<2x8x1xf32>
    %272 = vector.broadcast %271 : vector<2x8x1xf32> to vector<2x8x8xf32>
    %273 = arith.subf %269, %272 : vector<2x8x8xf32>
    %274 = math.exp %273 : vector<2x8x8xf32>
    %cst_79 = arith.constant dense<0.000000e+00> : vector<2x8xf32>
    %275 = vector.multi_reduction <add>, %274, %cst_79 [2] : vector<2x8x8xf32> to vector<2x8xf32>
    %276 = vector.shape_cast %275 : vector<2x8xf32> to vector<2x8x1xf32>
    %277 = tpu.reciprocal %276 {approx = true} : vector<2x8x1xf32> -> vector<2x8x1xf32>
    %278 = vector.broadcast %277 : vector<2x8x1xf32> to vector<2x8x8xf32>
    %279 = arith.mulf %274, %278 : vector<2x8x8xf32>
    %280 = arith.truncf %279 : vector<2x8x8xf32> to vector<2x8x8xbf16>
    %281 = arith.truncf %264 : vector<2x8x16xf32> to vector<2x8x16xbf16>
    "tpu.trace_start"() <{level = 10 : i32, message = "hqk,hke->hqe"}> : () -> ()
    %cst_80 = arith.constant dense<0.000000e+00> : vector<2x8x16xf32>
    %282 = tpu.matmul %280, %281, %cst_80 {dimension_numbers = #tpu.dot_dimension_numbers<[2], [1], [1], [2], [0, 0, 0, 1, 1, 2], [0], [0]>} : vector<2x8x8xbf16>, vector<2x8x16xbf16>, vector<2x8x16xf32> -> vector<2x8x16xf32>
    "tpu.trace_stop"() : () -> ()
    %283 = vector.extract_strided_slice %282 {offsets = [0, 0, 0], sizes = [1, 8, 16], strides = [1, 1, 1]} : vector<2x8x16xf32> to vector<1x8x16xf32>
    %284 = vector.shape_cast %283 : vector<1x8x16xf32> to vector<8x16xf32>
    %285 = vector.extract_strided_slice %282 {offsets = [1, 0, 0], sizes = [1, 8, 16], strides = [1, 1, 1]} : vector<2x8x16xf32> to vector<1x8x16xf32>
    %286 = vector.shape_cast %285 : vector<1x8x16xf32> to vector<8x16xf32>
    %287 = tpu.concatenate %284, %286 in 1 : vector<8x16xf32>, vector<8x16xf32> -> vector<8x32xf32>
    %288 = vector.extract_strided_slice %247 {offsets = [1, 0, 0], sizes = [1, 8, 96], strides = [1, 1, 1]} : vector<2x8x96xf32> to vector<1x8x96xf32>
    %289 = vector.shape_cast %288 : vector<1x8x96xf32> to vector<8x96xf32>
    %290 = vector.extract_strided_slice %289 {offsets = [0, 0], sizes = [8, 16], strides = [1, 1]} : vector<8x96xf32> to vector<8x16xf32>
    %291 = vector.extract_strided_slice %289 {offsets = [0, 16], sizes = [8, 16], strides = [1, 1]} : vector<8x96xf32> to vector<8x16xf32>
    %292 = vector.shape_cast %290 : vector<8x16xf32> to vector<1x8x16xf32>
    %293 = vector.shape_cast %291 : vector<8x16xf32> to vector<1x8x16xf32>
    %294 = tpu.concatenate %292, %293 in 0 : vector<1x8x16xf32>, vector<1x8x16xf32> -> vector<2x8x16xf32>
    %295 = vector.extract_strided_slice %289 {offsets = [0, 32], sizes = [8, 16], strides = [1, 1]} : vector<8x96xf32> to vector<8x16xf32>
    %296 = vector.extract_strided_slice %289 {offsets = [0, 48], sizes = [8, 16], strides = [1, 1]} : vector<8x96xf32> to vector<8x16xf32>
    %297 = vector.shape_cast %295 : vector<8x16xf32> to vector<1x8x16xf32>
    %298 = vector.shape_cast %296 : vector<8x16xf32> to vector<1x8x16xf32>
    %299 = tpu.concatenate %297, %298 in 0 : vector<1x8x16xf32>, vector<1x8x16xf32> -> vector<2x8x16xf32>
    %300 = vector.extract_strided_slice %289 {offsets = [0, 64], sizes = [8, 16], strides = [1, 1]} : vector<8x96xf32> to vector<8x16xf32>
    %301 = vector.extract_strided_slice %289 {offsets = [0, 80], sizes = [8, 16], strides = [1, 1]} : vector<8x96xf32> to vector<8x16xf32>
    %302 = vector.shape_cast %300 : vector<8x16xf32> to vector<1x8x16xf32>
    %303 = vector.shape_cast %301 : vector<8x16xf32> to vector<1x8x16xf32>
    %304 = tpu.concatenate %302, %303 in 0 : vector<1x8x16xf32>, vector<1x8x16xf32> -> vector<2x8x16xf32>
    %305 = arith.truncf %294 : vector<2x8x16xf32> to vector<2x8x16xbf16>
    %306 = arith.truncf %299 : vector<2x8x16xf32> to vector<2x8x16xbf16>
    "tpu.trace_start"() <{level = 10 : i32, message = "hqe,hke->hqk"}> : () -> ()
    %cst_81 = arith.constant dense<0.000000e+00> : vector<2x8x8xf32>
    %307 = tpu.matmul %305, %306, %cst_81 {dimension_numbers = #tpu.dot_dimension_numbers<[2], [2], [1], [1], [0, 0, 0, 1, 1, 1], [0], [0]>} : vector<2x8x16xbf16>, vector<2x8x16xbf16>, vector<2x8x8xf32> -> vector<2x8x8xf32>
    "tpu.trace_stop"() : () -> ()
    %308 = vector.broadcast %22 : vector<1x8x8xf32> to vector<2x8x8xf32>
    %309 = arith.addf %307, %308 : vector<2x8x8xf32>
    %cst_82 = arith.constant dense<0xFF800000> : vector<2x8xf32>
    %310 = vector.multi_reduction <maximumf>, %309, %cst_82 [2] : vector<2x8x8xf32> to vector<2x8xf32>
    %311 = vector.shape_cast %310 : vector<2x8xf32> to vector<2x8x1xf32>
    %312 = vector.broadcast %311 : vector<2x8x1xf32> to vector<2x8x8xf32>
    %313 = arith.subf %309, %312 : vector<2x8x8xf32>
    %314 = math.exp %313 : vector<2x8x8xf32>
    %cst_83 = arith.constant dense<0.000000e+00> : vector<2x8xf32>
    %315 = vector.multi_reduction <add>, %314, %cst_83 [2] : vector<2x8x8xf32> to vector<2x8xf32>
    %316 = vector.shape_cast %315 : vector<2x8xf32> to vector<2x8x1xf32>
    %317 = tpu.reciprocal %316 {approx = true} : vector<2x8x1xf32> -> vector<2x8x1xf32>
    %318 = vector.broadcast %317 : vector<2x8x1xf32> to vector<2x8x8xf32>
    %319 = arith.mulf %314, %318 : vector<2x8x8xf32>
    %320 = arith.truncf %319 : vector<2x8x8xf32> to vector<2x8x8xbf16>
    %321 = arith.truncf %304 : vector<2x8x16xf32> to vector<2x8x16xbf16>
    "tpu.trace_start"() <{level = 10 : i32, message = "hqk,hke->hqe"}> : () -> ()
    %cst_84 = arith.constant dense<0.000000e+00> : vector<2x8x16xf32>
    %322 = tpu.matmul %320, %321, %cst_84 {dimension_numbers = #tpu.dot_dimension_numbers<[2], [1], [1], [2], [0, 0, 0, 1, 1, 2], [0], [0]>} : vector<2x8x8xbf16>, vector<2x8x16xbf16>, vector<2x8x16xf32> -> vector<2x8x16xf32>
    "tpu.trace_stop"() : () -> ()
    %323 = vector.extract_strided_slice %322 {offsets = [0, 0, 0], sizes = [1, 8, 16], strides = [1, 1, 1]} : vector<2x8x16xf32> to vector<1x8x16xf32>
    %324 = vector.shape_cast %323 : vector<1x8x16xf32> to vector<8x16xf32>
    %325 = vector.extract_strided_slice %322 {offsets = [1, 0, 0], sizes = [1, 8, 16], strides = [1, 1, 1]} : vector<2x8x16xf32> to vector<1x8x16xf32>
    %326 = vector.shape_cast %325 : vector<1x8x16xf32> to vector<8x16xf32>
    %327 = tpu.concatenate %324, %326 in 1 : vector<8x16xf32>, vector<8x16xf32> -> vector<8x32xf32>
    %328 = tpu.concatenate %287, %327 in 0 : vector<8x32xf32>, vector<8x32xf32> -> vector<16x32xf32>
    %329 = arith.truncf %328 : vector<16x32xf32> to vector<16x32xbf16>
    %330 = arith.index_cast %c1_i32 : i32 to index
    %c0_85 = arith.constant 0 : index
    %c0_86 = arith.constant 0 : index
    %331 = vector.load %arg8[%330, %c0_85, %c0_86] : memref<2x32x32xbf16, #tpu.memory_space<vmem>>, vector<1x32x32xbf16>
    %332 = vector.shape_cast %331 : vector<1x32x32xbf16> to vector<32x32xbf16>
    %cst_87 = arith.constant dense<0.000000e+00> : vector<16x32xf32>
    %333 = tpu.matmul %329, %332, %cst_87 {dimension_numbers = #tpu.dot_dimension_numbers<[1], [0], [0], [1], [0, 0, 1, 1], [], []>} : vector<16x32xbf16>, vector<32x32xbf16>, vector<16x32xf32> -> vector<16x32xf32>
    %334 = arith.index_cast %c1_i32 : i32 to index
    %c0_88 = arith.constant 0 : index
    %c0_89 = arith.constant 0 : index
    %335 = vector.load %arg9[%334, %c0_88, %c0_89] : memref<2x1x32xf32, #tpu.memory_space<vmem>>, vector<1x1x32xf32>
    %336 = vector.shape_cast %335 : vector<1x1x32xf32> to vector<1x32xf32>
    %337 = vector.broadcast %336 : vector<1x32xf32> to vector<16x32xf32>
    %338 = arith.addf %333, %337 : vector<16x32xf32>
    %339 = arith.addf %338, %236 : vector<16x32xf32>
    %340 = arith.index_cast %c1_i32 : i32 to index
    %c0_90 = arith.constant 0 : index
    %c0_91 = arith.constant 0 : index
    %341 = vector.load %arg10[%340, %c0_90, %c0_91] : memref<2x1x32xf32, #tpu.memory_space<vmem>>, vector<1x1x32xf32>
    %342 = vector.shape_cast %341 : vector<1x1x32xf32> to vector<1x32xf32>
    %343 = arith.index_cast %c1_i32 : i32 to index
    %c0_92 = arith.constant 0 : index
    %c0_93 = arith.constant 0 : index
    %344 = vector.load %arg11[%343, %c0_92, %c0_93] : memref<2x1x32xf32, #tpu.memory_space<vmem>>, vector<1x1x32xf32>
    %345 = vector.shape_cast %344 : vector<1x1x32xf32> to vector<1x32xf32>
    %cst_94 = arith.constant dense<0.000000e+00> : vector<16xf32>
    %346 = vector.multi_reduction <add>, %339, %cst_94 [1] : vector<16x32xf32> to vector<16xf32>
    %347 = vector.shape_cast %346 : vector<16xf32> to vector<16x1xf32>
    %cst_95 = arith.constant 3.200000e+01 : f32
    %348 = vector.broadcast %cst_95 : f32 to vector<16x1xf32>
    %349 = arith.divf %347, %348 : vector<16x1xf32>
    %350 = vector.broadcast %349 : vector<16x1xf32> to vector<16x32xf32>
    %351 = arith.subf %339, %350 : vector<16x32xf32>
    %352 = arith.mulf %351, %351 : vector<16x32xf32>
    %cst_96 = arith.constant dense<0.000000e+00> : vector<16xf32>
    %353 = vector.multi_reduction <add>, %352, %cst_96 [1] : vector<16x32xf32> to vector<16xf32>
    %354 = vector.shape_cast %353 : vector<16xf32> to vector<16x1xf32>
    %cst_97 = arith.constant 3.200000e+01 : f32
    %355 = vector.broadcast %cst_97 : f32 to vector<16x1xf32>
    %356 = arith.divf %354, %355 : vector<16x1xf32>
    %cst_98 = arith.constant 9.99999996E-13 : f32
    %357 = vector.broadcast %cst_98 : f32 to vector<16x1xf32>
    %358 = arith.addf %356, %357 : vector<16x1xf32>
    %359 = math.rsqrt %358 : vector<16x1xf32>
    %360 = vector.broadcast %359 : vector<16x1xf32> to vector<16x32xf32>
    %361 = arith.mulf %351, %360 : vector<16x32xf32>
    %362 = vector.broadcast %342 : vector<1x32xf32> to vector<16x32xf32>
    %363 = arith.mulf %362, %361 : vector<16x32xf32>
    %364 = vector.broadcast %345 : vector<1x32xf32> to vector<16x32xf32>
    %365 = arith.addf %363, %364 : vector<16x32xf32>
    %366 = arith.truncf %365 : vector<16x32xf32> to vector<16x32xbf16>
    %367 = arith.index_cast %c1_i32 : i32 to index
    %c0_99 = arith.constant 0 : index
    %c0_100 = arith.constant 0 : index
    %368 = vector.load %arg12[%367, %c0_99, %c0_100] : memref<2x32x128xbf16, #tpu.memory_space<vmem>>, vector<1x32x128xbf16>
    %369 = vector.shape_cast %368 : vector<1x32x128xbf16> to vector<32x128xbf16>
    %cst_101 = arith.constant dense<0.000000e+00> : vector<16x128xf32>
    %370 = tpu.matmul %366, %369, %cst_101 {dimension_numbers = #tpu.dot_dimension_numbers<[1], [0], [0], [1], [0, 0, 1, 1], [], []>} : vector<16x32xbf16>, vector<32x128xbf16>, vector<16x128xf32> -> vector<16x128xf32>
    %371 = arith.index_cast %c1_i32 : i32 to index
    %c0_102 = arith.constant 0 : index
    %c0_103 = arith.constant 0 : index
    %372 = vector.load %arg13[%371, %c0_102, %c0_103] : memref<2x1x128xf32, #tpu.memory_space<vmem>>, vector<1x1x128xf32>
    %373 = vector.shape_cast %372 : vector<1x1x128xf32> to vector<1x128xf32>
    %374 = vector.broadcast %373 : vector<1x128xf32> to vector<16x128xf32>
    %375 = arith.addf %370, %374 : vector<16x128xf32>
    %cst_104 = arith.constant 5.000000e-01 : f32
    %376 = vector.broadcast %cst_104 : f32 to vector<16x128xf32>
    %377 = arith.mulf %375, %376 : vector<16x128xf32>
    %cst_105 = arith.constant 1.41421354 : f32
    %378 = vector.broadcast %cst_105 : f32 to vector<16x128xf32>
    %379 = arith.divf %375, %378 : vector<16x128xf32>
    %380 = math.erf %379 : vector<16x128xf32>
    %cst_106 = arith.constant 1.000000e+00 : f32
    %381 = vector.broadcast %cst_106 : f32 to vector<16x128xf32>
    %382 = arith.addf %381, %380 : vector<16x128xf32>
    %383 = arith.mulf %377, %382 : vector<16x128xf32>
    %384 = arith.truncf %383 : vector<16x128xf32> to vector<16x128xbf16>
    %385 = arith.index_cast %c1_i32 : i32 to index
    %c0_107 = arith.constant 0 : index
    %c0_108 = arith.constant 0 : index
    %386 = vector.load %arg14[%385, %c0_107, %c0_108] : memref<2x128x32xbf16, #tpu.memory_space<vmem>>, vector<1x128x32xbf16>
    %387 = vector.shape_cast %386 : vector<1x128x32xbf16> to vector<128x32xbf16>
    %cst_109 = arith.constant dense<0.000000e+00> : vector<16x32xf32>
    %388 = tpu.matmul %384, %387, %cst_109 {dimension_numbers = #tpu.dot_dimension_numbers<[1], [0], [0], [1], [0, 0, 1, 1], [], []>} : vector<16x128xbf16>, vector<128x32xbf16>, vector<16x32xf32> -> vector<16x32xf32>
    %389 = arith.index_cast %c1_i32 : i32 to index
    %c0_110 = arith.constant 0 : index
    %c0_111 = arith.constant 0 : index
    %390 = vector.load %arg15[%389, %c0_110, %c0_111] : memref<2x1x32xf32, #tpu.memory_space<vmem>>, vector<1x1x32xf32>
    %391 = vector.shape_cast %390 : vector<1x1x32xf32> to vector<1x32xf32>
    %392 = vector.broadcast %391 : vector<1x32xf32> to vector<16x32xf32>
    %393 = arith.addf %388, %392 : vector<16x32xf32>
    %394 = arith.addf %393, %365 : vector<16x32xf32>
    %395 = arith.index_cast %c1_i32 : i32 to index
    %c0_112 = arith.constant 0 : index
    %c0_113 = arith.constant 0 : index
    %396 = vector.load %arg16[%395, %c0_112, %c0_113] : memref<2x1x32xf32, #tpu.memory_space<vmem>>, vector<1x1x32xf32>
    %397 = vector.shape_cast %396 : vector<1x1x32xf32> to vector<1x32xf32>
    %398 = arith.index_cast %c1_i32 : i32 to index
    %c0_114 = arith.constant 0 : index
    %c0_115 = arith.constant 0 : index
    %399 = vector.load %arg17[%398, %c0_114, %c0_115] : memref<2x1x32xf32, #tpu.memory_space<vmem>>, vector<1x1x32xf32>
    %400 = vector.shape_cast %399 : vector<1x1x32xf32> to vector<1x32xf32>
    %cst_116 = arith.constant dense<0.000000e+00> : vector<16xf32>
    %401 = vector.multi_reduction <add>, %394, %cst_116 [1] : vector<16x32xf32> to vector<16xf32>
    %402 = vector.shape_cast %401 : vector<16xf32> to vector<16x1xf32>
    %cst_117 = arith.constant 3.200000e+01 : f32
    %403 = vector.broadcast %cst_117 : f32 to vector<16x1xf32>
    %404 = arith.divf %402, %403 : vector<16x1xf32>
    %405 = vector.broadcast %404 : vector<16x1xf32> to vector<16x32xf32>
    %406 = arith.subf %394, %405 : vector<16x32xf32>
    %407 = arith.mulf %406, %406 : vector<16x32xf32>
    %cst_118 = arith.constant dense<0.000000e+00> : vector<16xf32>
    %408 = vector.multi_reduction <add>, %407, %cst_118 [1] : vector<16x32xf32> to vector<16xf32>
    %409 = vector.shape_cast %408 : vector<16xf32> to vector<16x1xf32>
    %cst_119 = arith.constant 3.200000e+01 : f32
    %410 = vector.broadcast %cst_119 : f32 to vector<16x1xf32>
    %411 = arith.divf %409, %410 : vector<16x1xf32>
    %cst_120 = arith.constant 9.99999996E-13 : f32
    %412 = vector.broadcast %cst_120 : f32 to vector<16x1xf32>
    %413 = arith.addf %411, %412 : vector<16x1xf32>
    %414 = math.rsqrt %413 : vector<16x1xf32>
    %415 = vector.broadcast %414 : vector<16x1xf32> to vector<16x32xf32>
    %416 = arith.mulf %406, %415 : vector<16x32xf32>
    %417 = vector.broadcast %397 : vector<1x32xf32> to vector<16x32xf32>
    %418 = arith.mulf %417, %416 : vector<16x32xf32>
    %419 = vector.broadcast %400 : vector<1x32xf32> to vector<16x32xf32>
    %420 = arith.addf %418, %419 : vector<16x32xf32>
    %c2_i32 = arith.constant 2 : i32
    %421 = vector.shape_cast %420 : vector<16x32xf32> to vector<2x8x32xf32>
    %c0_121 = arith.constant 0 : index
    %c0_122 = arith.constant 0 : index
    %c0_123 = arith.constant 0 : index
    %422 = vector.load %arg18[%c0_121, %c0_122, %c0_123] : memref<2x8x32xf32, #tpu.memory_space<vmem>>, vector<2x8x32xf32>
    tpu.vector_store %arg18[%c0_121, %c0_122, %c0_123], %421 {strides = array<i32>} : memref<2x8x32xf32, #tpu.memory_space<vmem>>, vector<2x8x32xf32>,
    return
  }
  func.func @transform_0(%arg0: i32) -> (i32, i32, i32) {
    %c0_i32 = arith.constant 0 : i32
    %c0_i32_0 = arith.constant 0 : i32
    %c0_i32_1 = arith.constant 0 : i32
    return %arg0, %c0_i32, %c0_i32_0 : i32, i32, i32
  }
  func.func @transform_1(%arg0: i32) -> (i32, i32, i32) {
    %c0_i32 = arith.constant 0 : i32
    %c0_i32_0 = arith.constant 0 : i32
    %c0_i32_1 = arith.constant 0 : i32
    return %arg0, %c0_i32, %c0_i32_0 : i32, i32, i32
  }
  func.func @transform_2(%arg0: i32) -> (i32, i32) {
    %c0_i32 = arith.constant 0 : i32
    %c0_i32_0 = arith.constant 0 : i32
    %c0_i32_1 = arith.constant 0 : i32
    return %c0_i32, %c0_i32_0 : i32, i32
  }
  func.func @transform_3(%arg0: i32) -> (i32, i32) {
    %c0_i32 = arith.constant 0 : i32
    %c0_i32_0 = arith.constant 0 : i32
    %c0_i32_1 = arith.constant 0 : i32
    return %c0_i32, %c0_i32_0 : i32, i32
  }
  func.func @transform_4(%arg0: i32) -> (i32, i32) {
    %c0_i32 = arith.constant 0 : i32
    %c0_i32_0 = arith.constant 0 : i32
    %c0_i32_1 = arith.constant 0 : i32
    return %c0_i32, %c0_i32_0 : i32, i32
  }
  func.func @transform_5(%arg0: i32) -> (i32, i32, i32) {
    %c0_i32 = arith.constant 0 : i32
    %c0_i32_0 = arith.constant 0 : i32
    %c0_i32_1 = arith.constant 0 : i32
    %c0_i32_2 = arith.constant 0 : i32
    return %c0_i32, %c0_i32_0, %c0_i32_1 : i32, i32, i32
  }
  func.func @transform_6(%arg0: i32) -> (i32, i32, i32) {
    %c0_i32 = arith.constant 0 : i32
    %c0_i32_0 = arith.constant 0 : i32
    %c0_i32_1 = arith.constant 0 : i32
    %c0_i32_2 = arith.constant 0 : i32
    return %c0_i32, %c0_i32_0, %c0_i32_1 : i32, i32, i32
  }
  func.func @transform_7(%arg0: i32) -> (i32, i32, i32) {
    %c0_i32 = arith.constant 0 : i32
    %c0_i32_0 = arith.constant 0 : i32
    %c0_i32_1 = arith.constant 0 : i32
    %c0_i32_2 = arith.constant 0 : i32
    return %c0_i32, %c0_i32_0, %c0_i32_1 : i32, i32, i32
  }
  func.func @transform_8(%arg0: i32) -> (i32, i32, i32) {
    %c0_i32 = arith.constant 0 : i32
    %c0_i32_0 = arith.constant 0 : i32
    %c0_i32_1 = arith.constant 0 : i32
    %c0_i32_2 = arith.constant 0 : i32
    return %c0_i32, %c0_i32_0, %c0_i32_1 : i32, i32, i32
  }
  func.func @transform_9(%arg0: i32) -> (i32, i32, i32) {
    %c0_i32 = arith.constant 0 : i32
    %c0_i32_0 = arith.constant 0 : i32
    %c0_i32_1 = arith.constant 0 : i32
    %c0_i32_2 = arith.constant 0 : i32
    return %c0_i32, %c0_i32_0, %c0_i32_1 : i32, i32, i32
  }
  func.func @transform_10(%arg0: i32) -> (i32, i32, i32) {
    %c0_i32 = arith.constant 0 : i32
    %c0_i32_0 = arith.constant 0 : i32
    %c0_i32_1 = arith.constant 0 : i32
    %c0_i32_2 = arith.constant 0 : i32
    return %c0_i32, %c0_i32_0, %c0_i32_1 : i32, i32, i32
  }
  func.func @transform_11(%arg0: i32) -> (i32, i32, i32) {
    %c0_i32 = arith.constant 0 : i32
    %c0_i32_0 = arith.constant 0 : i32
    %c0_i32_1 = arith.constant 0 : i32
    %c0_i32_2 = arith.constant 0 : i32
    return %c0_i32, %c0_i32_0, %c0_i32_1 : i32, i32, i32
  }
  func.func @transform_12(%arg0: i32) -> (i32, i32, i32) {
    %c0_i32 = arith.constant 0 : i32
    %c0_i32_0 = arith.constant 0 : i32
    %c0_i32_1 = arith.constant 0 : i32
    %c0_i32_2 = arith.constant 0 : i32
    return %c0_i32, %c0_i32_0, %c0_i32_1 : i32, i32, i32
  }
  func.func @transform_13(%arg0: i32) -> (i32, i32, i32) {
    %c0_i32 = arith.constant 0 : i32
    %c0_i32_0 = arith.constant 0 : i32
    %c0_i32_1 = arith.constant 0 : i32
    %c0_i32_2 = arith.constant 0 : i32
    return %c0_i32, %c0_i32_0, %c0_i32_1 : i32, i32, i32
  }
  func.func @transform_14(%arg0: i32) -> (i32, i32, i32) {
    %c0_i32 = arith.constant 0 : i32
    %c0_i32_0 = arith.constant 0 : i32
    %c0_i32_1 = arith.constant 0 : i32
    %c0_i32_2 = arith.constant 0 : i32
    return %c0_i32, %c0_i32_0, %c0_i32_1 : i32, i32, i32
  }
  func.func @transform_15(%arg0: i32) -> (i32, i32, i32) {
    %c0_i32 = arith.constant 0 : i32
    %c0_i32_0 = arith.constant 0 : i32
    %c0_i32_1 = arith.constant 0 : i32
    %c0_i32_2 = arith.constant 0 : i32
    return %c0_i32, %c0_i32_0, %c0_i32_1 : i32, i32, i32
  }
  func.func @transform_16(%arg0: i32) -> (i32, i32, i32) {
    %c0_i32 = arith.constant 0 : i32
    %c0_i32_0 = arith.constant 0 : i32
    %c0_i32_1 = arith.constant 0 : i32
    %c0_i32_2 = arith.constant 0 : i32
    return %c0_i32, %c0_i32_0, %c0_i32_1 : i32, i32, i32
  }
  func.func @transform_17(%arg0: i32) -> (i32, i32, i32) {
    %c0_i32 = arith.constant 0 : i32
    %c0_i32_0 = arith.constant 0 : i32
    %c0_i32_1 = arith.constant 0 : i32
    return %arg0, %c0_i32, %c0_i32_0 : i32, i32, i32
  }
}

</mosaic_0001>

<llo_original>
// kernel: tpu_custom_call.1
$region0: #{tpu_custom_call.1}
  #allocation0 [shape = 'u32[]', space=smem, size = 0x4, offset = 0x4, fixed_abs, tag = 'smem constant byte address 0x4 - core index']
  #allocation1 [shape = 'u32[144,128]{1,0:T(1,128)}', space=vmem, size = 0x12000, scoped, tag = 'internal scratch']
  %s0 = inlined_call_operand.vmem [shape: f32[2,8,32], index: 0, kind: input, shape index: {}]
  %s1 = inlined_call_operand.vmem [shape: s32[2,1,8], index: 1, kind: input, shape index: {}]
  %s2 = inlined_call_operand.vmem [shape: f32[8,32], index: 2, kind: input, shape index: {}]
  %s3 = inlined_call_operand.vmem [shape: f32[1,32], index: 3, kind: input, shape index: {}]
  %s4 = inlined_call_operand.vmem [shape: f32[1,32], index: 4, kind: input, shape index: {}]
  %s5 = inlined_call_operand.vmem [shape: bf16[2,32,96], index: 5, kind: input, shape index: {}]
  %s6 = inlined_call_operand.vmem [shape: f32[2,1,96], index: 6, kind: input, shape index: {}]
  %s7 = inlined_call_operand.vmem [shape: bf16[2,32,32], index: 7, kind: input, shape index: {}]
  %s8 = inlined_call_operand.vmem [shape: f32[2,1,32], index: 8, kind: input, shape index: {}]
  %s9 = inlined_call_operand.vmem [shape: f32[2,1,32], index: 9, kind: input, shape index: {}]
  %s10 = inlined_call_operand.vmem [shape: f32[2,1,32], index: 10, kind: input, shape index: {}]
  %s11 = inlined_call_operand.vmem [shape: bf16[2,32,128], index: 11, kind: input, shape index: {}]
  %s12 = inlined_call_operand.vmem [shape: f32[2,1,128], index: 12, kind: input, shape index: {}]
  %s13 = inlined_call_operand.vmem [shape: bf16[2,128,32], index: 13, kind: input, shape index: {}]
  %s14 = inlined_call_operand.vmem [shape: f32[2,1,32], index: 14, kind: input, shape index: {}]
  %s15 = inlined_call_operand.vmem [shape: f32[2,1,32], index: 15, kind: input, shape index: {}]
  %s16 = inlined_call_operand.vmem [shape: f32[2,1,32], index: 16, kind: input, shape index: {}]
  %s17 = inlined_call_operand.hbm [shape: f32[2,8,32], index: 17, kind: output, shape index: {}]
  %s18 = sld [smem:[#allocation0]]
  $region78: #{tpu_custom_call.1} parent=0
    _
  %s20 = ssub.s32 1, %s18
  %s21 = scalar_select 0, %s20, %s18
  $region1: #{tpu_custom_call.1} parent=0
    #allocation2 [shape = 'u8[8192]{0}', space=vmem, size = 0x2000, scoped, tag = 'output window, operand 0, single buffered']
    #allocation3 [shape = 's32[1]{0}', space=sflag, size = 0x4, scoped, tag = 'scoped memory for tpu_custom_call.1']
    %22 = vsyncpa [#allocation3], 0
    // Predicated region
    $region2: #{tpu_custom_call.1} parent=1 // pred_check
      _
    $region3: #{tpu_custom_call.1} parent=1 // pred_check_branch
      %24 = sbr.rel (0) target = $region5
    $region4: #{tpu_custom_call.1} parent=1 // pred_region
      _
    $region5: #{tpu_custom_call.1} parent=1 // pred_fallthru
      _
    // Predicated region
    $region6: #{tpu_custom_call.1} parent=1 // pred_check
      _
    $region7: #{tpu_custom_call.1} parent=1 // pred_check_branch
      %26 = sbr.rel (0) target = $region9
    $region8: #{tpu_custom_call.1} parent=1 // pred_region
      _
    $region9: #{tpu_custom_call.1} parent=1 // pred_fallthru
      _
    // Predicated region
    $region10: #{tpu_custom_call.1} parent=1 // pred_check
      _
    $region11: #{tpu_custom_call.1} parent=1 // pred_check_branch
      %28 = sbr.rel (0) target = $region13
    $region12: #{tpu_custom_call.1} parent=1 // pred_region
      _
    $region13: #{tpu_custom_call.1} parent=1 // pred_fallthru
      _
    // Predicated region
    $region14: #{tpu_custom_call.1} parent=1 // pred_check
      _
    $region15: #{tpu_custom_call.1} parent=1 // pred_check_branch
      %30 = sbr.rel (0) target = $region17
    $region16: #{tpu_custom_call.1} parent=1 // pred_region
      _
    $region17: #{tpu_custom_call.1} parent=1 // pred_fallthru
      _
    // Predicated region
    $region18: #{tpu_custom_call.1} parent=1 // pred_check
      _
    $region19: #{tpu_custom_call.1} parent=1 // pred_check_branch
      %32 = sbr.rel (0) target = $region21
    $region20: #{tpu_custom_call.1} parent=1 // pred_region
      _
    $region21: #{tpu_custom_call.1} parent=1 // pred_fallthru
      _
    // Predicated region
    $region22: #{tpu_custom_call.1} parent=1 // pred_check
      _
    $region23: #{tpu_custom_call.1} parent=1 // pred_check_branch
      %34 = sbr.rel (0) target = $region25
    $region24: #{tpu_custom_call.1} parent=1 // pred_region
      _
    $region25: #{tpu_custom_call.1} parent=1 // pred_fallthru
      _
    // Predicated region
    $region26: #{tpu_custom_call.1} parent=1 // pred_check
      _
    $region27: #{tpu_custom_call.1} parent=1 // pred_check_branch
      %36 = sbr.rel (0) target = $region29
    $region28: #{tpu_custom_call.1} parent=1 // pred_region
      _
    $region29: #{tpu_custom_call.1} parent=1 // pred_fallthru
      _
    // Predicated region
    $region30: #{tpu_custom_call.1} parent=1 // pred_check
      _
    $region31: #{tpu_custom_call.1} parent=1 // pred_check_branch
      %38 = sbr.rel (0) target = $region33
    $region32: #{tpu_custom_call.1} parent=1 // pred_region
      _
    $region33: #{tpu_custom_call.1} parent=1 // pred_fallthru
      _
    // Predicated region
    $region34: #{tpu_custom_call.1} parent=1 // pred_check
      _
    $region35: #{tpu_custom_call.1} parent=1 // pred_check_branch
      %40 = sbr.rel (0) target = $region37
    $region36: #{tpu_custom_call.1} parent=1 // pred_region
      _
    $region37: #{tpu_custom_call.1} parent=1 // pred_fallthru
      _
    // Predicated region
    $region38: #{tpu_custom_call.1} parent=1 // pred_check
      _
    $region39: #{tpu_custom_call.1} parent=1 // pred_check_branch
      %42 = sbr.rel (0) target = $region41
    $region40: #{tpu_custom_call.1} parent=1 // pred_region
      _
    $region41: #{tpu_custom_call.1} parent=1 // pred_fallthru
      _
    // Predicated region
    $region42: #{tpu_custom_call.1} parent=1 // pred_check
      _
    $region43: #{tpu_custom_call.1} parent=1 // pred_check_branch
      %44 = sbr.rel (0) target = $region45
    $region44: #{tpu_custom_call.1} parent=1 // pred_region
      _
    $region45: #{tpu_custom_call.1} parent=1 // pred_fallthru
      _
    // Predicated region
    $region46: #{tpu_custom_call.1} parent=1 // pred_check
      _
    $region47: #{tpu_custom_call.1} parent=1 // pred_check_branch
      %46 = sbr.rel (0) target = $region49
    $region48: #{tpu_custom_call.1} parent=1 // pred_region
      _
    $region49: #{tpu_custom_call.1} parent=1 // pred_fallthru
      _
    // Predicated region
    $region50: #{tpu_custom_call.1} parent=1 // pred_check
      _
    $region51: #{tpu_custom_call.1} parent=1 // pred_check_branch
      %48 = sbr.rel (0) target = $region53
    $region52: #{tpu_custom_call.1} parent=1 // pred_region
      _
    $region53: #{tpu_custom_call.1} parent=1 // pred_fallthru
      _
    // Predicated region
    $region54: #{tpu_custom_call.1} parent=1 // pred_check
      _
    $region55: #{tpu_custom_call.1} parent=1 // pred_check_branch
      %50 = sbr.rel (0) target = $region57
    $region56: #{tpu_custom_call.1} parent=1 // pred_region
      _
    $region57: #{tpu_custom_call.1} parent=1 // pred_fallthru
      _
    // Predicated region
    $region58: #{tpu_custom_call.1} parent=1 // pred_check
      _
    $region59: #{tpu_custom_call.1} parent=1 // pred_check_branch
      %52 = sbr.rel (0) target = $region61
    $region60: #{tpu_custom_call.1} parent=1 // pred_region
      _
    $region61: #{tpu_custom_call.1} parent=1 // pred_fallthru
      _
    // Predicated region
    $region62: #{tpu_custom_call.1} parent=1 // pred_check
      _
    $region63: #{tpu_custom_call.1} parent=1 // pred_check_branch
      %54 = sbr.rel (0) target = $region65
    $region64: #{tpu_custom_call.1} parent=1 // pred_region
      _
    $region65: #{tpu_custom_call.1} parent=1 // pred_fallthru
      _
    // Predicated region
    $region66: #{tpu_custom_call.1} parent=1 // pred_check
      _
    $region67: #{tpu_custom_call.1} parent=1 // pred_check_branch
      %56 = sbr.rel (0) target = $region69
    $region68: #{tpu_custom_call.1} parent=1 // pred_region
      _
    $region69: #{tpu_custom_call.1} parent=1 // pred_fallthru
      _
    %v58 = vlaneseq
    %v59 = vshrl.u32 %v58, 7
    %v60 = vlaneseq
    %v61 = vand.u32 %v60, 127
    %vm62 = vcmp.le.s32.totalorder %v61, %v59
    %v63 = vld [vmem:[%s1] sm:$0x1]
    %vm64 = vcmp.gt.s32.totalorder %v63, 0
    %v65 = vsel %vm64, 1, 0
    %v66 = vlaneseq
    %v67 = vshrl.u32 %v66, 7
    %v68 = vsub.s32 0, %v67
    %v69 = vrot.slane %v65, %v68
    %vm70 = vcmp.eq.s32.totalorder %v69, 1
    %vm71 = vmand %vm70, %vm62
    %v72 = vsel %vm71, 0.0, -10000.0
    %s73 = scalar_lea.vmem %s1, 1
    %v74 = vld [vmem:[%s73] sm:$0x1]
    %vm75 = vcmp.gt.s32.totalorder %v74, 0
    %v76 = vsel %vm75, 1, 0
    %v77 = vlaneseq
    %v78 = vshrl.u32 %v77, 7
    %v79 = vsub.s32 0, %v78
    %v80 = vrot.slane %v76, %v79
    %vm81 = vcmp.eq.s32.totalorder %v80, 1
    %vm82 = vmand %vm81, %vm62
    %v83 = vsel %vm82, 0.0, -10000.0
    %v84 = vld [vmem:[%s0] sm:$0xff]
    %v85 = vld [vmem:[%s0 + $0x8] sm:$0xff]
    %v86 = vld [vmem:[%s2] sm:$0xff]
    %v87 = vadd.f32 %v84, %v86
    %v88 = vadd.f32 %v85, %v86
    %v89 = vld [vmem:[%s3] sm:$0x1]
    %v90 = vld [vmem:[%s4] sm:$0x1]
    %vm91 = vcmask 261120
    %v92 = vsel %vm91, %v87, 0.0
    %93 = vadd.xlane.f32.xlu0 %v92
    %v94 = vpop.xlane.xlu0 %93
    %v95 = vsel %vm91, %v88, 0.0
    %96 = vadd.xlane.f32.xlu0 %v95
    %v97 = vpop.xlane.xlu0 %96
    %v98 = vrcp.pop 32.0
    %v99 = vmul.f32 %v94, %v98
    %v100 = vmul.f32 %v97, %v98
    %v101 = vsub.f32 %v87, %v99
    %v102 = vsub.f32 %v88, %v100
    %v103 = vmul.f32 %v101, %v101
    %v104 = vmul.f32 %v102, %v102
    %v105 = vsel %vm91, %v103, 0.0
    %106 = vadd.xlane.f32.xlu0 %v105
    %v107 = vpop.xlane.xlu0 %106
    %v108 = vsel %vm91, %v104, 0.0
    %109 = vadd.xlane.f32.xlu0 %v108
    %v110 = vpop.xlane.xlu0 %109
    %v111 = vmul.f32 %v107, %v98
    %v112 = vmul.f32 %v110, %v98
    %v113 = vadd.f32 %v111, 1e-12
    %v114 = vadd.f32 %v112, 1e-12
    %v115 = vrsqrt.pop %v113
    %v116 = vrsqrt.pop %v114
    %v117 = vmul.f32 %v101, %v115
    %v118 = vmul.f32 %v102, %v116
    %v120 = vlaneseq
    %v121 = vshrl.u32 %v120, 7
    %v122 = vsub.s32 0, %v121
    %v123 = vrot.slane %v89, %v122
    %v125 = vmul.f32 %v123, %v117
    %v126 = vmul.f32 %v123, %v118
    %v128 = vlaneseq
    %v129 = vshrl.u32 %v128, 7
    %v130 = vsub.s32 0, %v129
    %v131 = vrot.slane %v90, %v130
    %v133 = vadd.f32 %v125, %v131
    %v134 = vadd.f32 %v126, %v131
    %v135 = vpack.c.bf16 %v134, %v133
    %v136 = vld [vmem:[%s5] sm:$0xf]
    %v137 = vld [vmem:[%s5 + $0x4] sm:$0xf]
    %v138 = vld [vmem:[%s5 + $0x8] sm:$0xf]
    %v139 = vld [vmem:[%s5 + $0xc] sm:$0xf]
    %v140 = vld [vmem:[%s6] sm:$0x1]
    %v142 = vlaneseq
    %v143 = vshrl.u32 %v142, 7
    %v144 = vsub.s32 0, %v143
    %v145 = vrot.slane %v140, %v144
    %v151 = vunpack.c.l.b16 %v136
    %v152 = vunpack.c.l.b16 %v137
    %v153 = vunpack.c.l.b16 %v138
    %v154 = vunpack.c.l.b16 %v139
    %v155 = vpack.c.b16 %v152, %v151
    %v156 = vpack.c.b16 %v154, %v153
    %v160 = vsel %vm91, %v135, 0
    %162 = vmatprep.subr.bf16.mxu0 0
    %163 = vmatpush1.bf16.msra.mxu0 %v155
    %164 = vmatprep.subr.bf16.mxu0 0
    %165 = vmatpush1.bf16.msra.mxu0 %v156
    %166 = vmatprep.subr.bf16.mxu0 0
    %167 = vmatpush1.bf16.msra.mxu0 0
    %168 = vmatprep.subr.bf16.mxu0 0
    %169 = vmatpush1.bf16.msra.mxu0 0
    %170 = vmatprep.subr.bf16.mxu0 0
    %171 = vmatpush1.bf16.msra.mxu0 0
    %172 = vmatprep.subr.bf16.mxu0 0
    %173 = vmatpush1.bf16.msra.mxu0 0
    %174 = vmatprep.subr.bf16.mxu0 0
    %175 = vmatpush1.bf16.msra.mxu0 0
    %176 = vmatprep.subr.bf16.mxu0 0
    %177 = vmatpush1.bf16.msra.mxu0 0
    %178 = vmatprep.subr.bf16.mxu0 0
    %179 = vmatpush1.bf16.msra.mxu0 0
    %180 = vmatprep.subr.bf16.mxu0 0
    %181 = vmatpush1.bf16.msra.mxu0 0
    %182 = vmatprep.subr.bf16.mxu0 0
    %183 = vmatpush1.bf16.msra.mxu0 0
    %184 = vmatprep.subr.bf16.mxu0 0
    %185 = vmatpush1.bf16.msra.mxu0 0
    %186 = vmatprep.subr.bf16.mxu0 0
    %187 = vmatpush1.bf16.msra.mxu0 0
    %188 = vmatprep.subr.bf16.mxu0 0
    %189 = vmatpush1.bf16.msra.mxu0 0
    %190 = vmatprep.subr.bf16.mxu0 0
    %191 = vmatpush1.bf16.msra.mxu0 0
    %192 = vmatprep.subr.bf16.mxu0 0
    %193 = vmatpush1.bf16.msra.mxu0 0
    %194 = vmatprep.mubr.bf16.mxu0 0
    %195 = vmatmul.mubr.bf16.gmra.mrb[0].mxu0 %v160
    %v196 = vpop.f32.mrb[0].mxu0
    %v197 = vadd.f32 %v145, %v196
    %v198 = vpop.f32.mrb[0].mxu0
    %v199 = vpop.f32.mrb[0].mxu0
    %v200 = vadd.f32 %v145, %v199
    %v201 = vpop.f32.mrb[0].mxu0
    %202 = vdwg.mxu0
    %204 = vrot.lane.b32.xlu0 %v197, 112
    %v205 = vpop.permute.xlu0 %204
    %v207 = vpack.c.bf16 %v197, %v197
    %v208 = vpack.c.bf16 %v205, %v205
    %210 = vrot.lane.b32.xlu0 %v207, 96
    %v211 = vpop.permute.xlu0 %210
    %vm212 = vcmask 130048
    %v214 = vsel %vm212, %v207, 0
    %v217 = vsel %vm212, %v211, 0
    %219 = vmatprep.subr.bf16.mxu0 0
    %220 = vmatpush1.bf16.xpose.msra.mxu0 %v217
    %221 = vmatprep.subr.bf16.mxu0 0
    %222 = vmatpush1.bf16.xpose.msra.mxu0 0
    %223 = vmatprep.subr.bf16.mxu0 0
    %224 = vmatpush1.bf16.xpose.msra.mxu0 0
    %225 = vmatprep.subr.bf16.mxu0 0
    %226 = vmatpush1.bf16.xpose.msra.mxu0 0
    %227 = vmatprep.subr.bf16.mxu0 0
    %228 = vmatpush1.bf16.xpose.msra.mxu0 0
    %229 = vmatprep.subr.bf16.mxu0 0
    %230 = vmatpush1.bf16.xpose.msra.mxu0 0
    %231 = vmatprep.subr.bf16.mxu0 0
    %232 = vmatpush1.bf16.xpose.msra.mxu0 0
    %233 = vmatprep.subr.bf16.mxu0 0
    %234 = vmatpush1.bf16.xpose.msra.mxu0 0
    %235 = vmatprep.subr.bf16.mxu0 0
    %236 = vmatpush1.bf16.xpose.msra.mxu0 0
    %237 = vmatprep.subr.bf16.mxu0 0
    %238 = vmatpush1.bf16.xpose.msra.mxu0 0
    %239 = vmatprep.subr.bf16.mxu0 0
    %240 = vmatpush1.bf16.xpose.msra.mxu0 0
    %241 = vmatprep.subr.bf16.mxu0 0
    %242 = vmatpush1.bf16.xpose.msra.mxu0 0
    %243 = vmatprep.subr.bf16.mxu0 0
    %244 = vmatpush1.bf16.xpose.msra.mxu0 0
    %245 = vmatprep.subr.bf16.mxu0 0
    %246 = vmatpush1.bf16.xpose.msra.mxu0 0
    %247 = vmatprep.subr.bf16.mxu0 0
    %248 = vmatpush1.bf16.xpose.msra.mxu0 0
    %249 = vmatprep.subr.bf16.mxu0 0
    %250 = vmatpush1.bf16.xpose.msra.mxu0 0
    %251 = vmatprep.mubr.bf16.mxu0 0
    %252 = vmatmul.mubr.bf16.gmra.mrb[0].mxu0 %v214
    %v253 = vpop.f32.mrb[0].mxu0
    %v254 = vadd.f32 %v72, %v253
    %v255 = vpop.f32.mrb[0].mxu0
    %v256 = vpop.f32.mrb[0].mxu0
    %v257 = vpop.f32.mrb[0].mxu0
    %258 = vdwg.mxu0
    %260 = vrot.lane.b32.xlu0 %v208, 96
    %v261 = vpop.permute.xlu0 %260
    %v263 = vsel %vm212, %v208, 0
    %v266 = vsel %vm212, %v261, 0
    %268 = vmatprep.subr.bf16.mxu0 0
    %269 = vmatpush1.bf16.xpose.msra.mxu0 %v266
    %270 = vmatprep.subr.bf16.mxu0 0
    %271 = vmatpush1.bf16.xpose.msra.mxu0 0
    %272 = vmatprep.subr.bf16.mxu0 0
    %273 = vmatpush1.bf16.xpose.msra.mxu0 0
    %274 = vmatprep.subr.bf16.mxu0 0
    %275 = vmatpush1.bf16.xpose.msra.mxu0 0
    %276 = vmatprep.subr.bf16.mxu0 0
    %277 = vmatpush1.bf16.xpose.msra.mxu0 0
    %278 = vmatprep.subr.bf16.mxu0 0
    %279 = vmatpush1.bf16.xpose.msra.mxu0 0
    %280 = vmatprep.subr.bf16.mxu0 0
    %281 = vmatpush1.bf16.xpose.msra.mxu0 0
    %282 = vmatprep.subr.bf16.mxu0 0
    %283 = vmatpush1.bf16.xpose.msra.mxu0 0
    %284 = vmatprep.subr.bf16.mxu0 0
    %285 = vmatpush1.bf16.xpose.msra.mxu0 0
    %286 = vmatprep.subr.bf16.mxu0 0
    %287 = vmatpush1.bf16.xpose.msra.mxu0 0
    %288 = vmatprep.subr.bf16.mxu0 0
    %289 = vmatpush1.bf16.xpose.msra.mxu0 0
    %290 = vmatprep.subr.bf16.mxu0 0
    %291 = vmatpush1.bf16.xpose.msra.mxu0 0
    %292 = vmatprep.subr.bf16.mxu0 0
    %293 = vmatpush1.bf16.xpose.msra.mxu0 0
    %294 = vmatprep.subr.bf16.mxu0 0
    %295 = vmatpush1.bf16.xpose.msra.mxu0 0
    %296 = vmatprep.subr.bf16.mxu0 0
    %297 = vmatpush1.bf16.xpose.msra.mxu0 0
    %298 = vmatprep.subr.bf16.mxu0 0
    %299 = vmatpush1.bf16.xpose.msra.mxu0 0
    %300 = vmatprep.mubr.bf16.mxu0 0
    %301 = vmatmul.mubr.bf16.gmra.mrb[0].mxu0 %v263
    %v302 = vpop.f32.mrb[0].mxu0
    %v303 = vadd.f32 %v72, %v302
    %v304 = vpop.f32.mrb[0].mxu0
    %v305 = vpop.f32.mrb[0].mxu0
    %v306 = vpop.f32.mrb[0].mxu0
    %307 = vdwg.mxu0
    %vm308 = vcmask 64512
    %v309 = vsel %vm308, %v254, -inf
    %310 = vmax.xlane.f32.xlu0 %v309
    %v311 = vpop.xlane.xlu0 %310
    %v312 = vsel %vm308, %v303, -inf
    %313 = vmax.xlane.f32.xlu0 %v312
    %v314 = vpop.xlane.xlu0 %313
    %v315 = vsub.f32 %v254, %v311
    %v316 = vsub.f32 %v303, %v314
    %v317 = vmul.f32 %v315, 1.442695
    %v318 = vpow.pop %v317
    %v319 = vmul.f32 %v316, 1.442695
    %v320 = vpow.pop %v319
    %v321 = vsel %vm308, %v318, 0.0
    %322 = vadd.xlane.f32.xlu0 %v321
    %v323 = vpop.xlane.xlu0 %322
    %v324 = vsel %vm308, %v320, 0.0
    %325 = vadd.xlane.f32.xlu0 %v324
    %v326 = vpop.xlane.xlu0 %325
    %v327 = vrcp.pop %v323
    %v328 = vrcp.pop %v326
    %v329 = vmul.f32 %v318, %v327
    %v330 = vmul.f32 %v320, %v328
    %v331 = vpack.c.bf16 %v329, %v329
    %v332 = vpack.c.bf16 %v330, %v330
    %333 = vrot.lane.b32.xlu0 %v207, 64
    %v334 = vpop.permute.xlu0 %333
    %v336 = vsel %vm308, %v331, 0
    %vm338 = vcmask 1043456
    %v340 = vsel %vm338, %v334, 0
    %342 = vmatprep.subr.bf16.mxu0 0
    %343 = vmatpush1.bf16.msra.mxu0 %v340
    %344 = vmatprep.subr.bf16.mxu0 0
    %345 = vmatpush1.bf16.msra.mxu0 0
    %346 = vmatprep.subr.bf16.mxu0 0
    %347 = vmatpush1.bf16.msra.mxu0 0
    %348 = vmatprep.subr.bf16.mxu0 0
    %349 = vmatpush1.bf16.msra.mxu0 0
    %350 = vmatprep.subr.bf16.mxu0 0
    %351 = vmatpush1.bf16.msra.mxu0 0
    %352 = vmatprep.subr.bf16.mxu0 0
    %353 = vmatpush1.bf16.msra.mxu0 0
    %354 = vmatprep.subr.bf16.mxu0 0
    %355 = vmatpush1.bf16.msra.mxu0 0
    %356 = vmatprep.subr.bf16.mxu0 0
    %357 = vmatpush1.bf16.msra.mxu0 0
    %358 = vmatprep.subr.bf16.mxu0 0
    %359 = vmatpush1.bf16.msra.mxu0 0
    %360 = vmatprep.subr.bf16.mxu0 0
    %361 = vmatpush1.bf16.msra.mxu0 0
    %362 = vmatprep.subr.bf16.mxu0 0
    %363 = vmatpush1.bf16.msra.mxu0 0
    %364 = vmatprep.subr.bf16.mxu0 0
    %365 = vmatpush1.bf16.msra.mxu0 0
    %366 = vmatprep.subr.bf16.mxu0 0
    %367 = vmatpush1.bf16.msra.mxu0 0
    %368 = vmatprep.subr.bf16.mxu0 0
    %369 = vmatpush1.bf16.msra.mxu0 0
    %370 = vmatprep.subr.bf16.mxu0 0
    %371 = vmatpush1.bf16.msra.mxu0 0
    %372 = vmatprep.subr.bf16.mxu0 0
    %373 = vmatpush1.bf16.msra.mxu0 0
    %374 = vmatprep.mubr.bf16.mxu0 0
    %375 = vmatmul.mubr.bf16.gmra.mrb[0].mxu0 %v336
    %v376 = vpop.f32.mrb[0].mxu0
    %v377 = vadd.f32 0.0, %v376
    %v378 = vpop.f32.mrb[0].mxu0
    %v379 = vpop.f32.mrb[0].mxu0
    %v380 = vpop.f32.mrb[0].mxu0
    %381 = vdwg.mxu0
    %382 = vrot.lane.b32.xlu0 %v208, 64
    %v383 = vpop.permute.xlu0 %382
    %v385 = vsel %vm308, %v332, 0
    %v388 = vsel %vm338, %v383, 0
    %390 = vmatprep.subr.bf16.mxu0 0
    %391 = vmatpush1.bf16.msra.mxu0 %v388
    %392 = vmatprep.subr.bf16.mxu0 0
    %393 = vmatpush1.bf16.msra.mxu0 0
    %394 = vmatprep.subr.bf16.mxu0 0
    %395 = vmatpush1.bf16.msra.mxu0 0
    %396 = vmatprep.subr.bf16.mxu0 0
    %397 = vmatpush1.bf16.msra.mxu0 0
    %398 = vmatprep.subr.bf16.mxu0 0
    %399 = vmatpush1.bf16.msra.mxu0 0
    %400 = vmatprep.subr.bf16.mxu0 0
    %401 = vmatpush1.bf16.msra.mxu0 0
    %402 = vmatprep.subr.bf16.mxu0 0
    %403 = vmatpush1.bf16.msra.mxu0 0
    %404 = vmatprep.subr.bf16.mxu0 0
    %405 = vmatpush1.bf16.msra.mxu0 0
    %406 = vmatprep.subr.bf16.mxu0 0
    %407 = vmatpush1.bf16.msra.mxu0 0
    %408 = vmatprep.subr.bf16.mxu0 0
    %409 = vmatpush1.bf16.msra.mxu0 0
    %410 = vmatprep.subr.bf16.mxu0 0
    %411 = vmatpush1.bf16.msra.mxu0 0
    %412 = vmatprep.subr.bf16.mxu0 0
    %413 = vmatpush1.bf16.msra.mxu0 0
    %414 = vmatprep.subr.bf16.mxu0 0
    %415 = vmatpush1.bf16.msra.mxu0 0
    %416 = vmatprep.subr.bf16.mxu0 0
    %417 = vmatpush1.bf16.msra.mxu0 0
    %418 = vmatprep.subr.bf16.mxu0 0
    %419 = vmatpush1.bf16.msra.mxu0 0
    %420 = vmatprep.subr.bf16.mxu0 0
    %421 = vmatpush1.bf16.msra.mxu0 0
    %422 = vmatprep.mubr.bf16.mxu0 0
    %423 = vmatmul.mubr.bf16.gmra.mrb[0].mxu0 %v385
    %v424 = vpop.f32.mrb[0].mxu0
    %v425 = vadd.f32 0.0, %v424
    %v426 = vpop.f32.mrb[0].mxu0
    %v427 = vpop.f32.mrb[0].mxu0
    %v428 = vpop.f32.mrb[0].mxu0
    %429 = vdwg.mxu0
    %431 = vrot.lane.b32.xlu0 %v425, 16
    %v432 = vpop.permute.xlu0 %431
    %v434 = vsel %vm212, %v377, %v432
    %436 = vrot.lane.b32.xlu0 %v200, 112
    %v437 = vpop.permute.xlu0 %436
    %v439 = vpack.c.bf16 %v200, %v200
    %v440 = vpack.c.bf16 %v437, %v437
    %442 = vrot.lane.b32.xlu0 %v439, 96
    %v443 = vpop.permute.xlu0 %442
    %v445 = vsel %vm212, %v439, 0
    %v448 = vsel %vm212, %v443, 0
    %450 = vmatprep.subr.bf16.mxu0 0
    %451 = vmatpush1.bf16.xpose.msra.mxu0 %v448
    %452 = vmatprep.subr.bf16.mxu0 0
    %453 = vmatpush1.bf16.xpose.msra.mxu0 0
    %454 = vmatprep.subr.bf16.mxu0 0
    %455 = vmatpush1.bf16.xpose.msra.mxu0 0
    %456 = vmatprep.subr.bf16.mxu0 0
    %457 = vmatpush1.bf16.xpose.msra.mxu0 0
    %458 = vmatprep.subr.bf16.mxu0 0
    %459 = vmatpush1.bf16.xpose.msra.mxu0 0
    %460 = vmatprep.subr.bf16.mxu0 0
    %461 = vmatpush1.bf16.xpose.msra.mxu0 0
    %462 = vmatprep.subr.bf16.mxu0 0
    %463 = vmatpush1.bf16.xpose.msra.mxu0 0
    %464 = vmatprep.subr.bf16.mxu0 0
    %465 = vmatpush1.bf16.xpose.msra.mxu0 0
    %466 = vmatprep.subr.bf16.mxu0 0
    %467 = vmatpush1.bf16.xpose.msra.mxu0 0
    %468 = vmatprep.subr.bf16.mxu0 0
    %469 = vmatpush1.bf16.xpose.msra.mxu0 0
    %470 = vmatprep.subr.bf16.mxu0 0
    %471 = vmatpush1.bf16.xpose.msra.mxu0 0
    %472 = vmatprep.subr.bf16.mxu0 0
    %473 = vmatpush1.bf16.xpose.msra.mxu0 0
    %474 = vmatprep.subr.bf16.mxu0 0
    %475 = vmatpush1.bf16.xpose.msra.mxu0 0
    %476 = vmatprep.subr.bf16.mxu0 0
    %477 = vmatpush1.bf16.xpose.msra.mxu0 0
    %478 = vmatprep.subr.bf16.mxu0 0
    %479 = vmatpush1.bf16.xpose.msra.mxu0 0
    %480 = vmatprep.subr.bf16.mxu0 0
    %481 = vmatpush1.bf16.xpose.msra.mxu0 0
    %482 = vmatprep.mubr.bf16.mxu0 0
    %483 = vmatmul.mubr.bf16.gmra.mrb[0].mxu0 %v445
    %v484 = vpop.f32.mrb[0].mxu0
    %v485 = vadd.f32 %v83, %v484
    %v486 = vpop.f32.mrb[0].mxu0
    %v487 = vpop.f32.mrb[0].mxu0
    %v488 = vpop.f32.mrb[0].mxu0
    %489 = vdwg.mxu0
    %491 = vrot.lane.b32.xlu0 %v440, 96
    %v492 = vpop.permute.xlu0 %491
    %v494 = vsel %vm212, %v440, 0
    %v497 = vsel %vm212, %v492, 0
    %499 = vmatprep.subr.bf16.mxu0 0
    %500 = vmatpush1.bf16.xpose.msra.mxu0 %v497
    %501 = vmatprep.subr.bf16.mxu0 0
    %502 = vmatpush1.bf16.xpose.msra.mxu0 0
    %503 = vmatprep.subr.bf16.mxu0 0
    %504 = vmatpush1.bf16.xpose.msra.mxu0 0
    %505 = vmatprep.subr.bf16.mxu0 0
    %506 = vmatpush1.bf16.xpose.msra.mxu0 0
    %507 = vmatprep.subr.bf16.mxu0 0
    %508 = vmatpush1.bf16.xpose.msra.mxu0 0
    %509 = vmatprep.subr.bf16.mxu0 0
    %510 = vmatpush1.bf16.xpose.msra.mxu0 0
    %511 = vmatprep.subr.bf16.mxu0 0
    %512 = vmatpush1.bf16.xpose.msra.mxu0 0
    %513 = vmatprep.subr.bf16.mxu0 0
    %514 = vmatpush1.bf16.xpose.msra.mxu0 0
    %515 = vmatprep.subr.bf16.mxu0 0
    %516 = vmatpush1.bf16.xpose.msra.mxu0 0
    %517 = vmatprep.subr.bf16.mxu0 0
    %518 = vmatpush1.bf16.xpose.msra.mxu0 0
    %519 = vmatprep.subr.bf16.mxu0 0
    %520 = vmatpush1.bf16.xpose.msra.mxu0 0
    %521 = vmatprep.subr.bf16.mxu0 0
    %522 = vmatpush1.bf16.xpose.msra.mxu0 0
    %523 = vmatprep.subr.bf16.mxu0 0
    %524 = vmatpush1.bf16.xpose.msra.mxu0 0
    %525 = vmatprep.subr.bf16.mxu0 0
    %526 = vmatpush1.bf16.xpose.msra.mxu0 0
    %527 = vmatprep.subr.bf16.mxu0 0
    %528 = vmatpush1.bf16.xpose.msra.mxu0 0
    %529 = vmatprep.subr.bf16.mxu0 0
    %530 = vmatpush1.bf16.xpose.msra.mxu0 0
    %531 = vmatprep.mubr.bf16.mxu0 0
    %532 = vmatmul.mubr.bf16.gmra.mrb[0].mxu0 %v494
    %v533 = vpop.f32.mrb[0].mxu0
    %v534 = vadd.f32 %v83, %v533
    %v535 = vpop.f32.mrb[0].mxu0
    %v536 = vpop.f32.mrb[0].mxu0
    %v537 = vpop.f32.mrb[0].mxu0
    %538 = vdwg.mxu0
    %v539 = vsel %vm308, %v485, -inf
    %540 = vmax.xlane.f32.xlu0 %v539
    %v541 = vpop.xlane.xlu0 %540
    %v542 = vsel %vm308, %v534, -inf
    %543 = vmax.xlane.f32.xlu0 %v542
    %v544 = vpop.xlane.xlu0 %543
    %v545 = vsub.f32 %v485, %v541
    %v546 = vsub.f32 %v534, %v544
    %v547 = vmul.f32 %v545, 1.442695
    %v548 = vpow.pop %v547
    %v549 = vmul.f32 %v546, 1.442695
    %v550 = vpow.pop %v549
    %v551 = vsel %vm308, %v548, 0.0
    %552 = vadd.xlane.f32.xlu0 %v551
    %v553 = vpop.xlane.xlu0 %552
    %v554 = vsel %vm308, %v550, 0.0
    %555 = vadd.xlane.f32.xlu0 %v554
    %v556 = vpop.xlane.xlu0 %555
    %v557 = vrcp.pop %v553
    %v558 = vrcp.pop %v556
    %v559 = vmul.f32 %v548, %v557
    %v560 = vmul.f32 %v550, %v558
    %v561 = vpack.c.bf16 %v559, %v559
    %v562 = vpack.c.bf16 %v560, %v560
    %563 = vrot.lane.b32.xlu0 %v439, 64
    %v564 = vpop.permute.xlu0 %563
    %v566 = vsel %vm308, %v561, 0
    %v569 = vsel %vm338, %v564, 0
    %571 = vmatprep.subr.bf16.mxu0 0
    %572 = vmatpush1.bf16.msra.mxu0 %v569
    %573 = vmatprep.subr.bf16.mxu0 0
    %574 = vmatpush1.bf16.msra.mxu0 0
    %575 = vmatprep.subr.bf16.mxu0 0
    %576 = vmatpush1.bf16.msra.mxu0 0
    %577 = vmatprep.subr.bf16.mxu0 0
    %578 = vmatpush1.bf16.msra.mxu0 0
    %579 = vmatprep.subr.bf16.mxu0 0
    %580 = vmatpush1.bf16.msra.mxu0 0
    %581 = vmatprep.subr.bf16.mxu0 0
    %582 = vmatpush1.bf16.msra.mxu0 0
    %583 = vmatprep.subr.bf16.mxu0 0
    %584 = vmatpush1.bf16.msra.mxu0 0
    %585 = vmatprep.subr.bf16.mxu0 0
    %586 = vmatpush1.bf16.msra.mxu0 0
    %587 = vmatprep.subr.bf16.mxu0 0
    %588 = vmatpush1.bf16.msra.mxu0 0
    %589 = vmatprep.subr.bf16.mxu0 0
    %590 = vmatpush1.bf16.msra.mxu0 0
    %591 = vmatprep.subr.bf16.mxu0 0
    %592 = vmatpush1.bf16.msra.mxu0 0
    %593 = vmatprep.subr.bf16.mxu0 0
    %594 = vmatpush1.bf16.msra.mxu0 0
    %595 = vmatprep.subr.bf16.mxu0 0
    %596 = vmatpush1.bf16.msra.mxu0 0
    %597 = vmatprep.subr.bf16.mxu0 0
    %598 = vmatpush1.bf16.msra.mxu0 0
    %599 = vmatprep.subr.bf16.mxu0 0
    %600 = vmatpush1.bf16.msra.mxu0 0
    %601 = vmatprep.subr.bf16.mxu0 0
    %602 = vmatpush1.bf16.msra.mxu0 0
    %603 = vmatprep.mubr.bf16.mxu0 0
    %604 = vmatmul.mubr.bf16.gmra.mrb[0].mxu0 %v566
    %v605 = vpop.f32.mrb[0].mxu0
    %v606 = vadd.f32 0.0, %v605
    %v607 = vpop.f32.mrb[0].mxu0
    %v608 = vpop.f32.mrb[0].mxu0
    %v609 = vpop.f32.mrb[0].mxu0
    %610 = vdwg.mxu0
    %611 = vrot.lane.b32.xlu0 %v440, 64
    %v612 = vpop.permute.xlu0 %611
    %v614 = vsel %vm308, %v562, 0
    %v617 = vsel %vm338, %v612, 0
    %619 = vmatprep.subr.bf16.mxu0 0
    %620 = vmatpush1.bf16.msra.mxu0 %v617
    %621 = vmatprep.subr.bf16.mxu0 0
    %622 = vmatpush1.bf16.msra.mxu0 0
    %623 = vmatprep.subr.bf16.mxu0 0
    %624 = vmatpush1.bf16.msra.mxu0 0
    %625 = vmatprep.subr.bf16.mxu0 0
    %626 = vmatpush1.bf16.msra.mxu0 0
    %627 = vmatprep.subr.bf16.mxu0 0
    %628 = vmatpush1.bf16.msra.mxu0 0
    %629 = vmatprep.subr.bf16.mxu0 0
    %630 = vmatpush1.bf16.msra.mxu0 0
    %631 = vmatprep.subr.bf16.mxu0 0
    %632 = vmatpush1.bf16.msra.mxu0 0
    %633 = vmatprep.subr.bf16.mxu0 0
    %634 = vmatpush1.bf16.msra.mxu0 0
    %635 = vmatprep.subr.bf16.mxu0 0
    %636 = vmatpush1.bf16.msra.mxu0 0
    %637 = vmatprep.subr.bf16.mxu0 0
    %638 = vmatpush1.bf16.msra.mxu0 0
    %639 = vmatprep.subr.bf16.mxu0 0
    %640 = vmatpush1.bf16.msra.mxu0 0
    %641 = vmatprep.subr.bf16.mxu0 0
    %642 = vmatpush1.bf16.msra.mxu0 0
    %643 = vmatprep.subr.bf16.mxu0 0
    %644 = vmatpush1.bf16.msra.mxu0 0
    %645 = vmatprep.subr.bf16.mxu0 0
    %646 = vmatpush1.bf16.msra.mxu0 0
    %647 = vmatprep.subr.bf16.mxu0 0
    %648 = vmatpush1.bf16.msra.mxu0 0
    %649 = vmatprep.subr.bf16.mxu0 0
    %650 = vmatpush1.bf16.msra.mxu0 0
    %651 = vmatprep.mubr.bf16.mxu0 0
    %652 = vmatmul.mubr.bf16.gmra.mrb[0].mxu0 %v614
    %v653 = vpop.f32.mrb[0].mxu0
    %v654 = vadd.f32 0.0, %v653
    %v655 = vpop.f32.mrb[0].mxu0
    %v656 = vpop.f32.mrb[0].mxu0
    %v657 = vpop.f32.mrb[0].mxu0
    %658 = vdwg.mxu0
    %660 = vrot.lane.b32.xlu0 %v654, 16
    %v661 = vpop.permute.xlu0 %660
    %v663 = vsel %vm212, %v606, %v661
    %v664 = vpack.c.bf16 %v663, %v434
    %v665 = vld [vmem:[%s7] sm:$0xf]
    %v666 = vld [vmem:[%s7 + $0x4] sm:$0xf]
    %v667 = vld [vmem:[%s7 + $0x8] sm:$0xf]
    %v668 = vld [vmem:[%s7 + $0xc] sm:$0xf]
    %v669 = vld [vmem:[%s8] sm:$0x1]
    %v671 = vlaneseq
    %v672 = vshrl.u32 %v671, 7
    %v673 = vsub.s32 0, %v672
    %v674 = vrot.slane %v669, %v673
    %v680 = vunpack.c.l.b16 %v665
    %v681 = vunpack.c.l.b16 %v666
    %v682 = vunpack.c.l.b16 %v667
    %v683 = vunpack.c.l.b16 %v668
    %v684 = vpack.c.b16 %v681, %v680
    %v685 = vpack.c.b16 %v683, %v682
    %v689 = vsel %vm91, %v664, 0
    %691 = vmatprep.subr.bf16.mxu0 0
    %692 = vmatpush1.bf16.msra.mxu0 %v684
    %693 = vmatprep.subr.bf16.mxu0 0
    %694 = vmatpush1.bf16.msra.mxu0 %v685
    %695 = vmatprep.subr.bf16.mxu0 0
    %696 = vmatpush1.bf16.msra.mxu0 0
    %697 = vmatprep.subr.bf16.mxu0 0
    %698 = vmatpush1.bf16.msra.mxu0 0
    %699 = vmatprep.subr.bf16.mxu0 0
    %700 = vmatpush1.bf16.msra.mxu0 0
    %701 = vmatprep.subr.bf16.mxu0 0
    %702 = vmatpush1.bf16.msra.mxu0 0
    %703 = vmatprep.subr.bf16.mxu0 0
    %704 = vmatpush1.bf16.msra.mxu0 0
    %705 = vmatprep.subr.bf16.mxu0 0
    %706 = vmatpush1.bf16.msra.mxu0 0
    %707 = vmatprep.subr.bf16.mxu0 0
    %708 = vmatpush1.bf16.msra.mxu0 0
    %709 = vmatprep.subr.bf16.mxu0 0
    %710 = vmatpush1.bf16.msra.mxu0 0
    %711 = vmatprep.subr.bf16.mxu0 0
    %712 = vmatpush1.bf16.msra.mxu0 0
    %713 = vmatprep.subr.bf16.mxu0 0
    %714 = vmatpush1.bf16.msra.mxu0 0
    %715 = vmatprep.subr.bf16.mxu0 0
    %716 = vmatpush1.bf16.msra.mxu0 0
    %717 = vmatprep.subr.bf16.mxu0 0
    %718 = vmatpush1.bf16.msra.mxu0 0
    %719 = vmatprep.subr.bf16.mxu0 0
    %720 = vmatpush1.bf16.msra.mxu0 0
    %721 = vmatprep.subr.bf16.mxu0 0
    %722 = vmatpush1.bf16.msra.mxu0 0
    %723 = vmatprep.mubr.bf16.mxu0 0
    %724 = vmatmul.mubr.bf16.gmra.mrb[0].mxu0 %v689
    %v725 = vpop.f32.mrb[0].mxu0
    %v726 = vadd.f32 %v674, %v725
    %v727 = vpop.f32.mrb[0].mxu0
    %v728 = vpop.f32.mrb[0].mxu0
    %v729 = vadd.f32 %v674, %v728
    %v730 = vpop.f32.mrb[0].mxu0
    %731 = vdwg.mxu0
    %v732 = vadd.f32 %v726, %v133
    %v733 = vadd.f32 %v729, %v134
    %v734 = vld [vmem:[%s9] sm:$0x1]
    %v735 = vld [vmem:[%s10] sm:$0x1]
    %v736 = vsel %vm91, %v732, 0.0
    %737 = vadd.xlane.f32.xlu0 %v736
    %v738 = vpop.xlane.xlu0 %737
    %v739 = vsel %vm91, %v733, 0.0
    %740 = vadd.xlane.f32.xlu0 %v739
    %v741 = vpop.xlane.xlu0 %740
    %v742 = vmul.f32 %v738, %v98
    %v743 = vmul.f32 %v741, %v98
    %v744 = vsub.f32 %v732, %v742
    %v745 = vsub.f32 %v733, %v743
    %v746 = vmul.f32 %v744, %v744
    %v747 = vmul.f32 %v745, %v745
    %v748 = vsel %vm91, %v746, 0.0
    %749 = vadd.xlane.f32.xlu0 %v748
    %v750 = vpop.xlane.xlu0 %749
    %v751 = vsel %vm91, %v747, 0.0
    %752 = vadd.xlane.f32.xlu0 %v751
    %v753 = vpop.xlane.xlu0 %752
    %v754 = vmul.f32 %v750, %v98
    %v755 = vmul.f32 %v753, %v98
    %v756 = vadd.f32 %v754, 1e-12
    %v757 = vadd.f32 %v755, 1e-12
    %v758 = vrsqrt.pop %v756
    %v759 = vrsqrt.pop %v757
    %v760 = vmul.f32 %v744, %v758
    %v761 = vmul.f32 %v745, %v759
    %v763 = vlaneseq
    %v764 = vshrl.u32 %v763, 7
    %v765 = vsub.s32 0, %v764
    %v766 = vrot.slane %v734, %v765
    %v768 = vmul.f32 %v766, %v760
    %v769 = vmul.f32 %v766, %v761
    %v771 = vlaneseq
    %v772 = vshrl.u32 %v771, 7
    %v773 = vsub.s32 0, %v772
    %v774 = vrot.slane %v735, %v773
    %v776 = vadd.f32 %v768, %v774
    %v777 = vadd.f32 %v769, %v774
    %v778 = vpack.c.bf16 %v777, %v776
    %v779 = vld [vmem:[%s11] sm:$0xf]
    %v780 = vld [vmem:[%s11 + $0x4] sm:$0xf]
    %v781 = vld [vmem:[%s11 + $0x8] sm:$0xf]
    %v782 = vld [vmem:[%s11 + $0xc] sm:$0xf]
    %v783 = vld [vmem:[%s12] sm:$0x1]
    %v785 = vlaneseq
    %v786 = vshrl.u32 %v785, 7
    %v787 = vsub.s32 0, %v786
    %v788 = vrot.slane %v783, %v787
    %v794 = vunpack.c.l.b16 %v779
    %v795 = vunpack.c.l.b16 %v780
    %v796 = vunpack.c.l.b16 %v781
    %v797 = vunpack.c.l.b16 %v782
    %v798 = vpack.c.b16 %v795, %v794
    %v799 = vpack.c.b16 %v797, %v796
    %v803 = vsel %vm91, %v778, 0
    %805 = vmatprep.subr.bf16.mxu0 0
    %806 = vmatpush1.bf16.msra.mxu0 %v798
    %807 = vmatprep.subr.bf16.mxu0 0
    %808 = vmatpush1.bf16.msra.mxu0 %v799
    %809 = vmatprep.subr.bf16.mxu0 0
    %810 = vmatpush1.bf16.msra.mxu0 0
    %811 = vmatprep.subr.bf16.mxu0 0
    %812 = vmatpush1.bf16.msra.mxu0 0
    %813 = vmatprep.subr.bf16.mxu0 0
    %814 = vmatpush1.bf16.msra.mxu0 0
    %815 = vmatprep.subr.bf16.mxu0 0
    %816 = vmatpush1.bf16.msra.mxu0 0
    %817 = vmatprep.subr.bf16.mxu0 0
    %818 = vmatpush1.bf16.msra.mxu0 0
    %819 = vmatprep.subr.bf16.mxu0 0
    %820 = vmatpush1.bf16.msra.mxu0 0
    %821 = vmatprep.subr.bf16.mxu0 0
    %822 = vmatpush1.bf16.msra.mxu0 0
    %823 = vmatprep.subr.bf16.mxu0 0
    %824 = vmatpush1.bf16.msra.mxu0 0
    %825 = vmatprep.subr.bf16.mxu0 0
    %826 = vmatpush1.bf16.msra.mxu0 0
    %827 = vmatprep.subr.bf16.mxu0 0
    %828 = vmatpush1.bf16.msra.mxu0 0
    %829 = vmatprep.subr.bf16.mxu0 0
    %830 = vmatpush1.bf16.msra.mxu0 0
    %831 = vmatprep.subr.bf16.mxu0 0
    %832 = vmatpush1.bf16.msra.mxu0 0
    %833 = vmatprep.subr.bf16.mxu0 0
    %834 = vmatpush1.bf16.msra.mxu0 0
    %835 = vmatprep.subr.bf16.mxu0 0
    %836 = vmatpush1.bf16.msra.mxu0 0
    %837 = vmatprep.mubr.bf16.mxu0 0
    %838 = vmatmul.mubr.bf16.gmra.mrb[0].mxu0 %v803
    %v839 = vpop.f32.mrb[0].mxu0
    %v840 = vadd.f32 %v788, %v839
    %v841 = vpop.f32.mrb[0].mxu0
    %v842 = vpop.f32.mrb[0].mxu0
    %v843 = vadd.f32 %v788, %v842
    %v844 = vpop.f32.mrb[0].mxu0
    %845 = vdwg.mxu0
    %v846 = vmul.f32 %v840, 0.5
    %v847 = vmul.f32 %v843, 0.5
    %v848 = vrcp.pop 1.4142135
    %v849 = vmul.f32 %v840, %v848
    %v850 = vmul.f32 %v843, %v848
    %v851 = verf.f32.pop %v849
    %v852 = verf.f32.pop %v850
    %v853 = vadd.f32 %v851, 1.0
    %v854 = vadd.f32 %v852, 1.0
    %v855 = vmul.f32 %v846, %v853
    %v856 = vmul.f32 %v847, %v854
    %v857 = vpack.c.bf16 %v856, %v855
    %v858 = vld [vmem:[%s13] sm:$0xf]
    %v859 = vld [vmem:[%s13 + $0x4] sm:$0xf]
    %v860 = vld [vmem:[%s13 + $0x8] sm:$0xf]
    %v861 = vld [vmem:[%s13 + $0xc] sm:$0xf]
    %v862 = vld [vmem:[%s13 + $0x10] sm:$0xf]
    %v863 = vld [vmem:[%s13 + $0x14] sm:$0xf]
    %v864 = vld [vmem:[%s13 + $0x18] sm:$0xf]
    %v865 = vld [vmem:[%s13 + $0x1c] sm:$0xf]
    %v866 = vld [vmem:[%s13 + $0x20] sm:$0xf]
    %v867 = vld [vmem:[%s13 + $0x24] sm:$0xf]
    %v868 = vld [vmem:[%s13 + $0x28] sm:$0xf]
    %v869 = vld [vmem:[%s13 + $0x2c] sm:$0xf]
    %v870 = vld [vmem:[%s13 + $0x30] sm:$0xf]
    %v871 = vld [vmem:[%s13 + $0x34] sm:$0xf]
    %v872 = vld [vmem:[%s13 + $0x38] sm:$0xf]
    %v873 = vld [vmem:[%s13 + $0x3c] sm:$0xf]
    %v874 = vld [vmem:[%s14] sm:$0x1]
    %v876 = vlaneseq
    %v877 = vshrl.u32 %v876, 7
    %v878 = vsub.s32 0, %v877
    %v879 = vrot.slane %v874, %v878
    %v897 = vunpack.c.l.b16 %v858
    %v898 = vunpack.c.l.b16 %v859
    %v899 = vunpack.c.l.b16 %v860
    %v900 = vunpack.c.l.b16 %v861
    %v901 = vunpack.c.l.b16 %v862
    %v902 = vunpack.c.l.b16 %v863
    %v903 = vunpack.c.l.b16 %v864
    %v904 = vunpack.c.l.b16 %v865
    %v905 = vunpack.c.l.b16 %v866
    %v906 = vunpack.c.l.b16 %v867
    %v907 = vunpack.c.l.b16 %v868
    %v908 = vunpack.c.l.b16 %v869
    %v909 = vunpack.c.l.b16 %v870
    %v910 = vunpack.c.l.b16 %v871
    %v911 = vunpack.c.l.b16 %v872
    %v912 = vunpack.c.l.b16 %v873
    %v913 = vpack.c.b16 %v898, %v897
    %v914 = vpack.c.b16 %v900, %v899
    %v915 = vpack.c.b16 %v902, %v901
    %v916 = vpack.c.b16 %v904, %v903
    %v917 = vpack.c.b16 %v906, %v905
    %v918 = vpack.c.b16 %v908, %v907
    %v919 = vpack.c.b16 %v910, %v909
    %v920 = vpack.c.b16 %v912, %v911
    %929 = vmatprep.subr.bf16.mxu0 0
    %930 = vmatpush1.bf16.msra.mxu0 %v913
    %931 = vmatprep.subr.bf16.mxu0 0
    %932 = vmatpush1.bf16.msra.mxu0 %v914
    %933 = vmatprep.subr.bf16.mxu0 0
    %934 = vmatpush1.bf16.msra.mxu0 %v915
    %935 = vmatprep.subr.bf16.mxu0 0
    %936 = vmatpush1.bf16.msra.mxu0 %v916
    %937 = vmatprep.subr.bf16.mxu0 0
    %938 = vmatpush1.bf16.msra.mxu0 %v917
    %939 = vmatprep.subr.bf16.mxu0 0
    %940 = vmatpush1.bf16.msra.mxu0 %v918
    %941 = vmatprep.subr.bf16.mxu0 0
    %942 = vmatpush1.bf16.msra.mxu0 %v919
    %943 = vmatprep.subr.bf16.mxu0 0
    %944 = vmatpush1.bf16.msra.mxu0 %v920
    %945 = vmatprep.subr.bf16.mxu0 0
    %946 = vmatpush1.bf16.msra.mxu0 0
    %947 = vmatprep.subr.bf16.mxu0 0
    %948 = vmatpush1.bf16.msra.mxu0 0
    %949 = vmatprep.subr.bf16.mxu0 0
    %950 = vmatpush1.bf16.msra.mxu0 0
    %951 = vmatprep.subr.bf16.mxu0 0
    %952 = vmatpush1.bf16.msra.mxu0 0
    %953 = vmatprep.subr.bf16.mxu0 0
    %954 = vmatpush1.bf16.msra.mxu0 0
    %955 = vmatprep.subr.bf16.mxu0 0
    %956 = vmatpush1.bf16.msra.mxu0 0
    %957 = vmatprep.subr.bf16.mxu0 0
    %958 = vmatpush1.bf16.msra.mxu0 0
    %959 = vmatprep.subr.bf16.mxu0 0
    %960 = vmatpush1.bf16.msra.mxu0 0
    %961 = vmatprep.mubr.bf16.mxu0 0
    %962 = vmatmul.mubr.bf16.gmra.mrb[0].mxu0 %v857
    %v963 = vpop.f32.mrb[0].mxu0
    %v964 = vadd.f32 %v879, %v963
    %v965 = vpop.f32.mrb[0].mxu0
    %v966 = vpop.f32.mrb[0].mxu0
    %v967 = vadd.f32 %v879, %v966
    %v968 = vpop.f32.mrb[0].mxu0
    %969 = vdwg.mxu0
    %v970 = vadd.f32 %v964, %v776
    %v971 = vadd.f32 %v967, %v777
    %v972 = vld [vmem:[%s15] sm:$0x1]
    %v973 = vld [vmem:[%s16] sm:$0x1]
    %v974 = vsel %vm91, %v970, 0.0
    %975 = vadd.xlane.f32.xlu0 %v974
    %v976 = vpop.xlane.xlu0 %975
    %v977 = vsel %vm91, %v971, 0.0
    %978 = vadd.xlane.f32.xlu0 %v977
    %v979 = vpop.xlane.xlu0 %978
    %v980 = vmul.f32 %v976, %v98
    %v981 = vmul.f32 %v979, %v98
    %v982 = vsub.f32 %v970, %v980
    %v983 = vsub.f32 %v971, %v981
    %v984 = vmul.f32 %v982, %v982
    %v985 = vmul.f32 %v983, %v983
    %v986 = vsel %vm91, %v984, 0.0
    %987 = vadd.xlane.f32.xlu0 %v986
    %v988 = vpop.xlane.xlu0 %987
    %v989 = vsel %vm91, %v985, 0.0
    %990 = vadd.xlane.f32.xlu0 %v989
    %v991 = vpop.xlane.xlu0 %990
    %v992 = vmul.f32 %v988, %v98
    %v993 = vmul.f32 %v991, %v98
    %v994 = vadd.f32 %v992, 1e-12
    %v995 = vadd.f32 %v993, 1e-12
    %v996 = vrsqrt.pop %v994
    %v997 = vrsqrt.pop %v995
    %v998 = vmul.f32 %v982, %v996
    %v999 = vmul.f32 %v983, %v997
    %v1001 = vlaneseq
    %v1002 = vshrl.u32 %v1001, 7
    %v1003 = vsub.s32 0, %v1002
    %v1004 = vrot.slane %v972, %v1003
    %v1006 = vmul.f32 %v1004, %v998
    %v1007 = vmul.f32 %v1004, %v999
    %v1009 = vlaneseq
    %v1010 = vshrl.u32 %v1009, 7
    %v1011 = vsub.s32 0, %v1010
    %v1012 = vrot.slane %v973, %v1011
    %v1014 = vadd.f32 %v1006, %v1012
    %v1015 = vadd.f32 %v1007, %v1012
    %v1016 = vpack.c.bf16 %v1015, %v1014
    %s1017 = scalar_lea.vmem %s5, 16
    %v1018 = vld [vmem:[%s1017] sm:$0xf]
    %v1019 = vld [vmem:[%s1017 + $0x4] sm:$0xf]
    %v1020 = vld [vmem:[%s1017 + $0x8] sm:$0xf]
    %v1021 = vld [vmem:[%s1017 + $0xc] sm:$0xf]
    %s1022 = scalar_lea.vmem %s6, 1
    %v1023 = vld [vmem:[%s1022] sm:$0x1]
    %v1025 = vlaneseq
    %v1026 = vshrl.u32 %v1025, 7
    %v1027 = vsub.s32 0, %v1026
    %v1028 = vrot.slane %v1023, %v1027
    %v1034 = vunpack.c.l.b16 %v1018
    %v1035 = vunpack.c.l.b16 %v1019
    %v1036 = vunpack.c.l.b16 %v1020
    %v1037 = vunpack.c.l.b16 %v1021
    %v1038 = vpack.c.b16 %v1035, %v1034
    %v1039 = vpack.c.b16 %v1037, %v1036
    %v1043 = vsel %vm91, %v1016, 0
    %1045 = vmatprep.subr.bf16.mxu0 0
    %1046 = vmatpush1.bf16.msra.mxu0 %v1038
    %1047 = vmatprep.subr.bf16.mxu0 0
    %1048 = vmatpush1.bf16.msra.mxu0 %v1039
    %1049 = vmatprep.subr.bf16.mxu0 0
    %1050 = vmatpush1.bf16.msra.mxu0 0
    %1051 = vmatprep.subr.bf16.mxu0 0
    %1052 = vmatpush1.bf16.msra.mxu0 0
    %1053 = vmatprep.subr.bf16.mxu0 0
    %1054 = vmatpush1.bf16.msra.mxu0 0
    %1055 = vmatprep.subr.bf16.mxu0 0
    %1056 = vmatpush1.bf16.msra.mxu0 0
    %1057 = vmatprep.subr.bf16.mxu0 0
    %1058 = vmatpush1.bf16.msra.mxu0 0
    %1059 = vmatprep.subr.bf16.mxu0 0
    %1060 = vmatpush1.bf16.msra.mxu0 0
    %1061 = vmatprep.subr.bf16.mxu0 0
    %1062 = vmatpush1.bf16.msra.mxu0 0
    %1063 = vmatprep.subr.bf16.mxu0 0
    %1064 = vmatpush1.bf16.msra.mxu0 0
    %1065 = vmatprep.subr.bf16.mxu0 0
    %1066 = vmatpush1.bf16.msra.mxu0 0
    %1067 = vmatprep.subr.bf16.mxu0 0
    %1068 = vmatpush1.bf16.msra.mxu0 0
    %1069 = vmatprep.subr.bf16.mxu0 0
    %1070 = vmatpush1.bf16.msra.mxu0 0
    %1071 = vmatprep.subr.bf16.mxu0 0
    %1072 = vmatpush1.bf16.msra.mxu0 0
    %1073 = vmatprep.subr.bf16.mxu0 0
    %1074 = vmatpush1.bf16.msra.mxu0 0
    %1075 = vmatprep.subr.bf16.mxu0 0
    %1076 = vmatpush1.bf16.msra.mxu0 0
    %1077 = vmatprep.mubr.bf16.mxu0 0
    %1078 = vmatmul.mubr.bf16.gmra.mrb[0].mxu0 %v1043
    %v1079 = vpop.f32.mrb[0].mxu0
    %v1080 = vadd.f32 %v1028, %v1079
    %v1081 = vpop.f32.mrb[0].mxu0
    %v1082 = vpop.f32.mrb[0].mxu0
    %v1083 = vadd.f32 %v1028, %v1082
    %v1084 = vpop.f32.mrb[0].mxu0
    %1085 = vdwg.mxu0
    %1087 = vrot.lane.b32.xlu0 %v1080, 112
    %v1088 = vpop.permute.xlu0 %1087
    %v1090 = vpack.c.bf16 %v1080, %v1080
    %v1091 = vpack.c.bf16 %v1088, %v1088
    %1093 = vrot.lane.b32.xlu0 %v1090, 96
    %v1094 = vpop.permute.xlu0 %1093
    %v1096 = vsel %vm212, %v1090, 0
    %v1099 = vsel %vm212, %v1094, 0
    %1101 = vmatprep.subr.bf16.mxu0 0
    %1102 = vmatpush1.bf16.xpose.msra.mxu0 %v1099
    %1103 = vmatprep.subr.bf16.mxu0 0
    %1104 = vmatpush1.bf16.xpose.msra.mxu0 0
    %1105 = vmatprep.subr.bf16.mxu0 0
    %1106 = vmatpush1.bf16.xpose.msra.mxu0 0
    %1107 = vmatprep.subr.bf16.mxu0 0
    %1108 = vmatpush1.bf16.xpose.msra.mxu0 0
    %1109 = vmatprep.subr.bf16.mxu0 0
    %1110 = vmatpush1.bf16.xpose.msra.mxu0 0
    %1111 = vmatprep.subr.bf16.mxu0 0
    %1112 = vmatpush1.bf16.xpose.msra.mxu0 0
    %1113 = vmatprep.subr.bf16.mxu0 0
    %1114 = vmatpush1.bf16.xpose.msra.mxu0 0
    %1115 = vmatprep.subr.bf16.mxu0 0
    %1116 = vmatpush1.bf16.xpose.msra.mxu0 0
    %1117 = vmatprep.subr.bf16.mxu0 0
    %1118 = vmatpush1.bf16.xpose.msra.mxu0 0
    %1119 = vmatprep.subr.bf16.mxu0 0
    %1120 = vmatpush1.bf16.xpose.msra.mxu0 0
    %1121 = vmatprep.subr.bf16.mxu0 0
    %1122 = vmatpush1.bf16.xpose.msra.mxu0 0
    %1123 = vmatprep.subr.bf16.mxu0 0
    %1124 = vmatpush1.bf16.xpose.msra.mxu0 0
    %1125 = vmatprep.subr.bf16.mxu0 0
    %1126 = vmatpush1.bf16.xpose.msra.mxu0 0
    %1127 = vmatprep.subr.bf16.mxu0 0
    %1128 = vmatpush1.bf16.xpose.msra.mxu0 0
    %1129 = vmatprep.subr.bf16.mxu0 0
    %1130 = vmatpush1.bf16.xpose.msra.mxu0 0
    %1131 = vmatprep.subr.bf16.mxu0 0
    %1132 = vmatpush1.bf16.xpose.msra.mxu0 0
    %1133 = vmatprep.mubr.bf16.mxu0 0
    %1134 = vmatmul.mubr.bf16.gmra.mrb[0].mxu0 %v1096
    %v1135 = vpop.f32.mrb[0].mxu0
    %v1136 = vadd.f32 %v72, %v1135
    %v1137 = vpop.f32.mrb[0].mxu0
    %v1138 = vpop.f32.mrb[0].mxu0
    %v1139 = vpop.f32.mrb[0].mxu0
    %1140 = vdwg.mxu0
    %1142 = vrot.lane.b32.xlu0 %v1091, 96
    %v1143 = vpop.permute.xlu0 %1142
    %v1145 = vsel %vm212, %v1091, 0
    %v1148 = vsel %vm212, %v1143, 0
    %1150 = vmatprep.subr.bf16.mxu0 0
    %1151 = vmatpush1.bf16.xpose.msra.mxu0 %v1148
    %1152 = vmatprep.subr.bf16.mxu0 0
    %1153 = vmatpush1.bf16.xpose.msra.mxu0 0
    %1154 = vmatprep.subr.bf16.mxu0 0
    %1155 = vmatpush1.bf16.xpose.msra.mxu0 0
    %1156 = vmatprep.subr.bf16.mxu0 0
    %1157 = vmatpush1.bf16.xpose.msra.mxu0 0
    %1158 = vmatprep.subr.bf16.mxu0 0
    %1159 = vmatpush1.bf16.xpose.msra.mxu0 0
    %1160 = vmatprep.subr.bf16.mxu0 0
    %1161 = vmatpush1.bf16.xpose.msra.mxu0 0
    %1162 = vmatprep.subr.bf16.mxu0 0
    %1163 = vmatpush1.bf16.xpose.msra.mxu0 0
    %1164 = vmatprep.subr.bf16.mxu0 0
    %1165 = vmatpush1.bf16.xpose.msra.mxu0 0
    %1166 = vmatprep.subr.bf16.mxu0 0
    %1167 = vmatpush1.bf16.xpose.msra.mxu0 0
    %1168 = vmatprep.subr.bf16.mxu0 0
    %1169 = vmatpush1.bf16.xpose.msra.mxu0 0
    %1170 = vmatprep.subr.bf16.mxu0 0
    %1171 = vmatpush1.bf16.xpose.msra.mxu0 0
    %1172 = vmatprep.subr.bf16.mxu0 0
    %1173 = vmatpush1.bf16.xpose.msra.mxu0 0
    %1174 = vmatprep.subr.bf16.mxu0 0
    %1175 = vmatpush1.bf16.xpose.msra.mxu0 0
    %1176 = vmatprep.subr.bf16.mxu0 0
    %1177 = vmatpush1.bf16.xpose.msra.mxu0 0
    %1178 = vmatprep.subr.bf16.mxu0 0
    %1179 = vmatpush1.bf16.xpose.msra.mxu0 0
    %1180 = vmatprep.subr.bf16.mxu0 0
    %1181 = vmatpush1.bf16.xpose.msra.mxu0 0
    %1182 = vmatprep.mubr.bf16.mxu0 0
    %1183 = vmatmul.mubr.bf16.gmra.mrb[0].mxu0 %v1145
    %v1184 = vpop.f32.mrb[0].mxu0
    %v1185 = vadd.f32 %v72, %v1184
    %v1186 = vpop.f32.mrb[0].mxu0
    %v1187 = vpop.f32.mrb[0].mxu0
    %v1188 = vpop.f32.mrb[0].mxu0
    %1189 = vdwg.mxu0
    %v1190 = vsel %vm308, %v1136, -inf
    %1191 = vmax.xlane.f32.xlu0 %v1190
    %v1192 = vpop.xlane.xlu0 %1191
    %v1193 = vsel %vm308, %v1185, -inf
    %1194 = vmax.xlane.f32.xlu0 %v1193
    %v1195 = vpop.xlane.xlu0 %1194
    %v1196 = vsub.f32 %v1136, %v1192
    %v1197 = vsub.f32 %v1185, %v1195
    %v1198 = vmul.f32 %v1196, 1.442695
    %v1199 = vpow.pop %v1198
    %v1200 = vmul.f32 %v1197, 1.442695
    %v1201 = vpow.pop %v1200
    %v1202 = vsel %vm308, %v1199, 0.0
    %1203 = vadd.xlane.f32.xlu0 %v1202
    %v1204 = vpop.xlane.xlu0 %1203
    %v1205 = vsel %vm308, %v1201, 0.0
    %1206 = vadd.xlane.f32.xlu0 %v1205
    %v1207 = vpop.xlane.xlu0 %1206
    %v1208 = vrcp.pop %v1204
    %v1209 = vrcp.pop %v1207
    %v1210 = vmul.f32 %v1199, %v1208
    %v1211 = vmul.f32 %v1201, %v1209
    %v1212 = vpack.c.bf16 %v1210, %v1210
    %v1213 = vpack.c.bf16 %v1211, %v1211
    %1214 = vrot.lane.b32.xlu0 %v1090, 64
    %v1215 = vpop.permute.xlu0 %1214
    %v1217 = vsel %vm308, %v1212, 0
    %v1220 = vsel %vm338, %v1215, 0
    %1222 = vmatprep.subr.bf16.mxu0 0
    %1223 = vmatpush1.bf16.msra.mxu0 %v1220
    %1224 = vmatprep.subr.bf16.mxu0 0
    %1225 = vmatpush1.bf16.msra.mxu0 0
    %1226 = vmatprep.subr.bf16.mxu0 0
    %1227 = vmatpush1.bf16.msra.mxu0 0
    %1228 = vmatprep.subr.bf16.mxu0 0
    %1229 = vmatpush1.bf16.msra.mxu0 0
    %1230 = vmatprep.subr.bf16.mxu0 0
    %1231 = vmatpush1.bf16.msra.mxu0 0
    %1232 = vmatprep.subr.bf16.mxu0 0
    %1233 = vmatpush1.bf16.msra.mxu0 0
    %1234 = vmatprep.subr.bf16.mxu0 0
    %1235 = vmatpush1.bf16.msra.mxu0 0
    %1236 = vmatprep.subr.bf16.mxu0 0
    %1237 = vmatpush1.bf16.msra.mxu0 0
    %1238 = vmatprep.subr.bf16.mxu0 0
    %1239 = vmatpush1.bf16.msra.mxu0 0
    %1240 = vmatprep.subr.bf16.mxu0 0
    %1241 = vmatpush1.bf16.msra.mxu0 0
    %1242 = vmatprep.subr.bf16.mxu0 0
    %1243 = vmatpush1.bf16.msra.mxu0 0
    %1244 = vmatprep.subr.bf16.mxu0 0
    %1245 = vmatpush1.bf16.msra.mxu0 0
    %1246 = vmatprep.subr.bf16.mxu0 0
    %1247 = vmatpush1.bf16.msra.mxu0 0
    %1248 = vmatprep.subr.bf16.mxu0 0
    %1249 = vmatpush1.bf16.msra.mxu0 0
    %1250 = vmatprep.subr.bf16.mxu0 0
    %1251 = vmatpush1.bf16.msra.mxu0 0
    %1252 = vmatprep.subr.bf16.mxu0 0
    %1253 = vmatpush1.bf16.msra.mxu0 0
    %1254 = vmatprep.mubr.bf16.mxu0 0
    %1255 = vmatmul.mubr.bf16.gmra.mrb[0].mxu0 %v1217
    %v1256 = vpop.f32.mrb[0].mxu0
    %v1257 = vadd.f32 0.0, %v1256
    %v1258 = vpop.f32.mrb[0].mxu0
    %v1259 = vpop.f32.mrb[0].mxu0
    %v1260 = vpop.f32.mrb[0].mxu0
    %1261 = vdwg.mxu0
    %1262 = vrot.lane.b32.xlu0 %v1091, 64
    %v1263 = vpop.permute.xlu0 %1262
    %v1265 = vsel %vm308, %v1213, 0
    %v1268 = vsel %vm338, %v1263, 0
    %1270 = vmatprep.subr.bf16.mxu0 0
    %1271 = vmatpush1.bf16.msra.mxu0 %v1268
    %1272 = vmatprep.subr.bf16.mxu0 0
    %1273 = vmatpush1.bf16.msra.mxu0 0
    %1274 = vmatprep.subr.bf16.mxu0 0
    %1275 = vmatpush1.bf16.msra.mxu0 0
    %1276 = vmatprep.subr.bf16.mxu0 0
    %1277 = vmatpush1.bf16.msra.mxu0 0
    %1278 = vmatprep.subr.bf16.mxu0 0
    %1279 = vmatpush1.bf16.msra.mxu0 0
    %1280 = vmatprep.subr.bf16.mxu0 0
    %1281 = vmatpush1.bf16.msra.mxu0 0
    %1282 = vmatprep.subr.bf16.mxu0 0
    %1283 = vmatpush1.bf16.msra.mxu0 0
    %1284 = vmatprep.subr.bf16.mxu0 0
    %1285 = vmatpush1.bf16.msra.mxu0 0
    %1286 = vmatprep.subr.bf16.mxu0 0
    %1287 = vmatpush1.bf16.msra.mxu0 0
    %1288 = vmatprep.subr.bf16.mxu0 0
    %1289 = vmatpush1.bf16.msra.mxu0 0
    %1290 = vmatprep.subr.bf16.mxu0 0
    %1291 = vmatpush1.bf16.msra.mxu0 0
    %1292 = vmatprep.subr.bf16.mxu0 0
    %1293 = vmatpush1.bf16.msra.mxu0 0
    %1294 = vmatprep.subr.bf16.mxu0 0
    %1295 = vmatpush1.bf16.msra.mxu0 0
    %1296 = vmatprep.subr.bf16.mxu0 0
    %1297 = vmatpush1.bf16.msra.mxu0 0
    %1298 = vmatprep.subr.bf16.mxu0 0
    %1299 = vmatpush1.bf16.msra.mxu0 0
    %1300 = vmatprep.subr.bf16.mxu0 0
    %1301 = vmatpush1.bf16.msra.mxu0 0
    %1302 = vmatprep.mubr.bf16.mxu0 0
    %1303 = vmatmul.mubr.bf16.gmra.mrb[0].mxu0 %v1265
    %v1304 = vpop.f32.mrb[0].mxu0
    %v1305 = vadd.f32 0.0, %v1304
    %v1306 = vpop.f32.mrb[0].mxu0
    %v1307 = vpop.f32.mrb[0].mxu0
    %v1308 = vpop.f32.mrb[0].mxu0
    %1309 = vdwg.mxu0
    %1311 = vrot.lane.b32.xlu0 %v1305, 16
    %v1312 = vpop.permute.xlu0 %1311
    %v1314 = vsel %vm212, %v1257, %v1312
    %1316 = vrot.lane.b32.xlu0 %v1083, 112
    %v1317 = vpop.permute.xlu0 %1316
    %v1319 = vpack.c.bf16 %v1083, %v1083
    %v1320 = vpack.c.bf16 %v1317, %v1317
    %1322 = vrot.lane.b32.xlu0 %v1319, 96
    %v1323 = vpop.permute.xlu0 %1322
    %v1325 = vsel %vm212, %v1319, 0
    %v1328 = vsel %vm212, %v1323, 0
    %1330 = vmatprep.subr.bf16.mxu0 0
    %1331 = vmatpush1.bf16.xpose.msra.mxu0 %v1328
    %1332 = vmatprep.subr.bf16.mxu0 0
    %1333 = vmatpush1.bf16.xpose.msra.mxu0 0
    %1334 = vmatprep.subr.bf16.mxu0 0
    %1335 = vmatpush1.bf16.xpose.msra.mxu0 0
    %1336 = vmatprep.subr.bf16.mxu0 0
    %1337 = vmatpush1.bf16.xpose.msra.mxu0 0
    %1338 = vmatprep.subr.bf16.mxu0 0
    %1339 = vmatpush1.bf16.xpose.msra.mxu0 0
    %1340 = vmatprep.subr.bf16.mxu0 0
    %1341 = vmatpush1.bf16.xpose.msra.mxu0 0
    %1342 = vmatprep.subr.bf16.mxu0 0
    %1343 = vmatpush1.bf16.xpose.msra.mxu0 0
    %1344 = vmatprep.subr.bf16.mxu0 0
    %1345 = vmatpush1.bf16.xpose.msra.mxu0 0
    %1346 = vmatprep.subr.bf16.mxu0 0
    %1347 = vmatpush1.bf16.xpose.msra.mxu0 0
    %1348 = vmatprep.subr.bf16.mxu0 0
    %1349 = vmatpush1.bf16.xpose.msra.mxu0 0
    %1350 = vmatprep.subr.bf16.mxu0 0
    %1351 = vmatpush1.bf16.xpose.msra.mxu0 0
    %1352 = vmatprep.subr.bf16.mxu0 0
    %1353 = vmatpush1.bf16.xpose.msra.mxu0 0
    %1354 = vmatprep.subr.bf16.mxu0 0
    %1355 = vmatpush1.bf16.xpose.msra.mxu0 0
    %1356 = vmatprep.subr.bf16.mxu0 0
    %1357 = vmatpush1.bf16.xpose.msra.mxu0 0
    %1358 = vmatprep.subr.bf16.mxu0 0
    %1359 = vmatpush1.bf16.xpose.msra.mxu0 0
    %1360 = vmatprep.subr.bf16.mxu0 0
    %1361 = vmatpush1.bf16.xpose.msra.mxu0 0
    %1362 = vmatprep.mubr.bf16.mxu0 0
    %1363 = vmatmul.mubr.bf16.gmra.mrb[0].mxu0 %v1325
    %v1364 = vpop.f32.mrb[0].mxu0
    %v1365 = vadd.f32 %v83, %v1364
    %v1366 = vpop.f32.mrb[0].mxu0
    %v1367 = vpop.f32.mrb[0].mxu0
    %v1368 = vpop.f32.mrb[0].mxu0
    %1369 = vdwg.mxu0
    %1371 = vrot.lane.b32.xlu0 %v1320, 96
    %v1372 = vpop.permute.xlu0 %1371
    %v1374 = vsel %vm212, %v1320, 0
    %v1377 = vsel %vm212, %v1372, 0
    %1379 = vmatprep.subr.bf16.mxu0 0
    %1380 = vmatpush1.bf16.xpose.msra.mxu0 %v1377
    %1381 = vmatprep.subr.bf16.mxu0 0
    %1382 = vmatpush1.bf16.xpose.msra.mxu0 0
    %1383 = vmatprep.subr.bf16.mxu0 0
    %1384 = vmatpush1.bf16.xpose.msra.mxu0 0
    %1385 = vmatprep.subr.bf16.mxu0 0
    %1386 = vmatpush1.bf16.xpose.msra.mxu0 0
    %1387 = vmatprep.subr.bf16.mxu0 0
    %1388 = vmatpush1.bf16.xpose.msra.mxu0 0
    %1389 = vmatprep.subr.bf16.mxu0 0
    %1390 = vmatpush1.bf16.xpose.msra.mxu0 0
    %1391 = vmatprep.subr.bf16.mxu0 0
    %1392 = vmatpush1.bf16.xpose.msra.mxu0 0
    %1393 = vmatprep.subr.bf16.mxu0 0
    %1394 = vmatpush1.bf16.xpose.msra.mxu0 0
    %1395 = vmatprep.subr.bf16.mxu0 0
    %1396 = vmatpush1.bf16.xpose.msra.mxu0 0
    %1397 = vmatprep.subr.bf16.mxu0 0
    %1398 = vmatpush1.bf16.xpose.msra.mxu0 0
    %1399 = vmatprep.subr.bf16.mxu0 0
    %1400 = vmatpush1.bf16.xpose.msra.mxu0 0
    %1401 = vmatprep.subr.bf16.mxu0 0
    %1402 = vmatpush1.bf16.xpose.msra.mxu0 0
    %1403 = vmatprep.subr.bf16.mxu0 0
    %1404 = vmatpush1.bf16.xpose.msra.mxu0 0
    %1405 = vmatprep.subr.bf16.mxu0 0
    %1406 = vmatpush1.bf16.xpose.msra.mxu0 0
    %1407 = vmatprep.subr.bf16.mxu0 0
    %1408 = vmatpush1.bf16.xpose.msra.mxu0 0
    %1409 = vmatprep.subr.bf16.mxu0 0
    %1410 = vmatpush1.bf16.xpose.msra.mxu0 0
    %1411 = vmatprep.mubr.bf16.mxu0 0
    %1412 = vmatmul.mubr.bf16.gmra.mrb[0].mxu0 %v1374
    %v1413 = vpop.f32.mrb[0].mxu0
    %v1414 = vadd.f32 %v83, %v1413
    %v1415 = vpop.f32.mrb[0].mxu0
    %v1416 = vpop.f32.mrb[0].mxu0
    %v1417 = vpop.f32.mrb[0].mxu0
    %1418 = vdwg.mxu0
    %v1419 = vsel %vm308, %v1365, -inf
    %1420 = vmax.xlane.f32.xlu0 %v1419
    %v1421 = vpop.xlane.xlu0 %1420
    %v1422 = vsel %vm308, %v1414, -inf
    %1423 = vmax.xlane.f32.xlu0 %v1422
    %v1424 = vpop.xlane.xlu0 %1423
    %v1425 = vsub.f32 %v1365, %v1421
    %v1426 = vsub.f32 %v1414, %v1424
    %v1427 = vmul.f32 %v1425, 1.442695
    %v1428 = vpow.pop %v1427
    %v1429 = vmul.f32 %v1426, 1.442695
    %v1430 = vpow.pop %v1429
    %v1431 = vsel %vm308, %v1428, 0.0
    %1432 = vadd.xlane.f32.xlu0 %v1431
    %v1433 = vpop.xlane.xlu0 %1432
    %v1434 = vsel %vm308, %v1430, 0.0
    %1435 = vadd.xlane.f32.xlu0 %v1434
    %v1436 = vpop.xlane.xlu0 %1435
    %v1437 = vrcp.pop %v1433
    %v1438 = vrcp.pop %v1436
    %v1439 = vmul.f32 %v1428, %v1437
    %v1440 = vmul.f32 %v1430, %v1438
    %v1441 = vpack.c.bf16 %v1439, %v1439
    %v1442 = vpack.c.bf16 %v1440, %v1440
    %1443 = vrot.lane.b32.xlu0 %v1319, 64
    %v1444 = vpop.permute.xlu0 %1443
    %v1446 = vsel %vm308, %v1441, 0
    %v1449 = vsel %vm338, %v1444, 0
    %1451 = vmatprep.subr.bf16.mxu0 0
    %1452 = vmatpush1.bf16.msra.mxu0 %v1449
    %1453 = vmatprep.subr.bf16.mxu0 0
    %1454 = vmatpush1.bf16.msra.mxu0 0
    %1455 = vmatprep.subr.bf16.mxu0 0
    %1456 = vmatpush1.bf16.msra.mxu0 0
    %1457 = vmatprep.subr.bf16.mxu0 0
    %1458 = vmatpush1.bf16.msra.mxu0 0
    %1459 = vmatprep.subr.bf16.mxu0 0
    %1460 = vmatpush1.bf16.msra.mxu0 0
    %1461 = vmatprep.subr.bf16.mxu0 0
    %1462 = vmatpush1.bf16.msra.mxu0 0
    %1463 = vmatprep.subr.bf16.mxu0 0
    %1464 = vmatpush1.bf16.msra.mxu0 0
    %1465 = vmatprep.subr.bf16.mxu0 0
    %1466 = vmatpush1.bf16.msra.mxu0 0
    %1467 = vmatprep.subr.bf16.mxu0 0
    %1468 = vmatpush1.bf16.msra.mxu0 0
    %1469 = vmatprep.subr.bf16.mxu0 0
    %1470 = vmatpush1.bf16.msra.mxu0 0
    %1471 = vmatprep.subr.bf16.mxu0 0
    %1472 = vmatpush1.bf16.msra.mxu0 0
    %1473 = vmatprep.subr.bf16.mxu0 0
    %1474 = vmatpush1.bf16.msra.mxu0 0
    %1475 = vmatprep.subr.bf16.mxu0 0
    %1476 = vmatpush1.bf16.msra.mxu0 0
    %1477 = vmatprep.subr.bf16.mxu0 0
    %1478 = vmatpush1.bf16.msra.mxu0 0
    %1479 = vmatprep.subr.bf16.mxu0 0
    %1480 = vmatpush1.bf16.msra.mxu0 0
    %1481 = vmatprep.subr.bf16.mxu0 0
    %1482 = vmatpush1.bf16.msra.mxu0 0
    %1483 = vmatprep.mubr.bf16.mxu0 0
    %1484 = vmatmul.mubr.bf16.gmra.mrb[0].mxu0 %v1446
    %v1485 = vpop.f32.mrb[0].mxu0
    %v1486 = vadd.f32 0.0, %v1485
    %v1487 = vpop.f32.mrb[0].mxu0
    %v1488 = vpop.f32.mrb[0].mxu0
    %v1489 = vpop.f32.mrb[0].mxu0
    %1490 = vdwg.mxu0
    %1491 = vrot.lane.b32.xlu0 %v1320, 64
    %v1492 = vpop.permute.xlu0 %1491
    %v1494 = vsel %vm308, %v1442, 0
    %v1497 = vsel %vm338, %v1492, 0
    %1499 = vmatprep.subr.bf16.mxu0 0
    %1500 = vmatpush1.bf16.msra.mxu0 %v1497
    %1501 = vmatprep.subr.bf16.mxu0 0
    %1502 = vmatpush1.bf16.msra.mxu0 0
    %1503 = vmatprep.subr.bf16.mxu0 0
    %1504 = vmatpush1.bf16.msra.mxu0 0
    %1505 = vmatprep.subr.bf16.mxu0 0
    %1506 = vmatpush1.bf16.msra.mxu0 0
    %1507 = vmatprep.subr.bf16.mxu0 0
    %1508 = vmatpush1.bf16.msra.mxu0 0
    %1509 = vmatprep.subr.bf16.mxu0 0
    %1510 = vmatpush1.bf16.msra.mxu0 0
    %1511 = vmatprep.subr.bf16.mxu0 0
    %1512 = vmatpush1.bf16.msra.mxu0 0
    %1513 = vmatprep.subr.bf16.mxu0 0
    %1514 = vmatpush1.bf16.msra.mxu0 0
    %1515 = vmatprep.subr.bf16.mxu0 0
    %1516 = vmatpush1.bf16.msra.mxu0 0
    %1517 = vmatprep.subr.bf16.mxu0 0
    %1518 = vmatpush1.bf16.msra.mxu0 0
    %1519 = vmatprep.subr.bf16.mxu0 0
    %1520 = vmatpush1.bf16.msra.mxu0 0
    %1521 = vmatprep.subr.bf16.mxu0 0
    %1522 = vmatpush1.bf16.msra.mxu0 0
    %1523 = vmatprep.subr.bf16.mxu0 0
    %1524 = vmatpush1.bf16.msra.mxu0 0
    %1525 = vmatprep.subr.bf16.mxu0 0
    %1526 = vmatpush1.bf16.msra.mxu0 0
    %1527 = vmatprep.subr.bf16.mxu0 0
    %1528 = vmatpush1.bf16.msra.mxu0 0
    %1529 = vmatprep.subr.bf16.mxu0 0
    %1530 = vmatpush1.bf16.msra.mxu0 0
    %1531 = vmatprep.mubr.bf16.mxu0 0
    %1532 = vmatmul.mubr.bf16.gmra.mrb[0].mxu0 %v1494
    %v1533 = vpop.f32.mrb[0].mxu0
    %v1534 = vadd.f32 0.0, %v1533
    %v1535 = vpop.f32.mrb[0].mxu0
    %v1536 = vpop.f32.mrb[0].mxu0
    %v1537 = vpop.f32.mrb[0].mxu0
    %1538 = vdwg.mxu0
    %1540 = vrot.lane.b32.xlu0 %v1534, 16
    %v1541 = vpop.permute.xlu0 %1540
    %v1543 = vsel %vm212, %v1486, %v1541
    %v1544 = vpack.c.bf16 %v1543, %v1314
    %s1545 = scalar_lea.vmem %s7, 16
    %v1546 = vld [vmem:[%s1545] sm:$0xf]
    %v1547 = vld [vmem:[%s1545 + $0x4] sm:$0xf]
    %v1548 = vld [vmem:[%s1545 + $0x8] sm:$0xf]
    %v1549 = vld [vmem:[%s1545 + $0xc] sm:$0xf]
    %s1550 = scalar_lea.vmem %s8, 1
    %v1551 = vld [vmem:[%s1550] sm:$0x1]
    %v1553 = vlaneseq
    %v1554 = vshrl.u32 %v1553, 7
    %v1555 = vsub.s32 0, %v1554
    %v1556 = vrot.slane %v1551, %v1555
    %v1562 = vunpack.c.l.b16 %v1546
    %v1563 = vunpack.c.l.b16 %v1547
    %v1564 = vunpack.c.l.b16 %v1548
    %v1565 = vunpack.c.l.b16 %v1549
    %v1566 = vpack.c.b16 %v1563, %v1562
    %v1567 = vpack.c.b16 %v1565, %v1564
    %v1571 = vsel %vm91, %v1544, 0
    %1573 = vmatprep.subr.bf16.mxu0 0
    %1574 = vmatpush1.bf16.msra.mxu0 %v1566
    %1575 = vmatprep.subr.bf16.mxu0 0
    %1576 = vmatpush1.bf16.msra.mxu0 %v1567
    %1577 = vmatprep.subr.bf16.mxu0 0
    %1578 = vmatpush1.bf16.msra.mxu0 0
    %1579 = vmatprep.subr.bf16.mxu0 0
    %1580 = vmatpush1.bf16.msra.mxu0 0
    %1581 = vmatprep.subr.bf16.mxu0 0
    %1582 = vmatpush1.bf16.msra.mxu0 0
    %1583 = vmatprep.subr.bf16.mxu0 0
    %1584 = vmatpush1.bf16.msra.mxu0 0
    %1585 = vmatprep.subr.bf16.mxu0 0
    %1586 = vmatpush1.bf16.msra.mxu0 0
    %1587 = vmatprep.subr.bf16.mxu0 0
    %1588 = vmatpush1.bf16.msra.mxu0 0
    %1589 = vmatprep.subr.bf16.mxu0 0
    %1590 = vmatpush1.bf16.msra.mxu0 0
    %1591 = vmatprep.subr.bf16.mxu0 0
    %1592 = vmatpush1.bf16.msra.mxu0 0
    %1593 = vmatprep.subr.bf16.mxu0 0
    %1594 = vmatpush1.bf16.msra.mxu0 0
    %1595 = vmatprep.subr.bf16.mxu0 0
    %1596 = vmatpush1.bf16.msra.mxu0 0
    %1597 = vmatprep.subr.bf16.mxu0 0
    %1598 = vmatpush1.bf16.msra.mxu0 0
    %1599 = vmatprep.subr.bf16.mxu0 0
    %1600 = vmatpush1.bf16.msra.mxu0 0
    %1601 = vmatprep.subr.bf16.mxu0 0
    %1602 = vmatpush1.bf16.msra.mxu0 0
    %1603 = vmatprep.subr.bf16.mxu0 0
    %1604 = vmatpush1.bf16.msra.mxu0 0
    %1605 = vmatprep.mubr.bf16.mxu0 0
    %1606 = vmatmul.mubr.bf16.gmra.mrb[0].mxu0 %v1571
    %v1607 = vpop.f32.mrb[0].mxu0
    %v1608 = vadd.f32 %v1556, %v1607
    %v1609 = vpop.f32.mrb[0].mxu0
    %v1610 = vpop.f32.mrb[0].mxu0
    %v1611 = vadd.f32 %v1556, %v1610
    %v1612 = vpop.f32.mrb[0].mxu0
    %1613 = vdwg.mxu0
    %v1614 = vadd.f32 %v1608, %v1014
    %v1615 = vadd.f32 %v1611, %v1015
    %s1616 = scalar_lea.vmem %s9, 1
    %v1617 = vld [vmem:[%s1616] sm:$0x1]
    %s1618 = scalar_lea.vmem %s10, 1
    %v1619 = vld [vmem:[%s1618] sm:$0x1]
    %v1620 = vsel %vm91, %v1614, 0.0
    %1621 = vadd.xlane.f32.xlu0 %v1620
    %v1622 = vpop.xlane.xlu0 %1621
    %v1623 = vsel %vm91, %v1615, 0.0
    %1624 = vadd.xlane.f32.xlu0 %v1623
    %v1625 = vpop.xlane.xlu0 %1624
    %v1626 = vmul.f32 %v1622, %v98
    %v1627 = vmul.f32 %v1625, %v98
    %v1628 = vsub.f32 %v1614, %v1626
    %v1629 = vsub.f32 %v1615, %v1627
    %v1630 = vmul.f32 %v1628, %v1628
    %v1631 = vmul.f32 %v1629, %v1629
    %v1632 = vsel %vm91, %v1630, 0.0
    %1633 = vadd.xlane.f32.xlu0 %v1632
    %v1634 = vpop.xlane.xlu0 %1633
    %v1635 = vsel %vm91, %v1631, 0.0
    %1636 = vadd.xlane.f32.xlu0 %v1635
    %v1637 = vpop.xlane.xlu0 %1636
    %v1638 = vmul.f32 %v1634, %v98
    %v1639 = vmul.f32 %v1637, %v98
    %v1640 = vadd.f32 %v1638, 1e-12
    %v1641 = vadd.f32 %v1639, 1e-12
    %v1642 = vrsqrt.pop %v1640
    %v1643 = vrsqrt.pop %v1641
    %v1644 = vmul.f32 %v1628, %v1642
    %v1645 = vmul.f32 %v1629, %v1643
    %v1647 = vlaneseq
    %v1648 = vshrl.u32 %v1647, 7
    %v1649 = vsub.s32 0, %v1648
    %v1650 = vrot.slane %v1617, %v1649
    %v1652 = vmul.f32 %v1650, %v1644
    %v1653 = vmul.f32 %v1650, %v1645
    %v1655 = vlaneseq
    %v1656 = vshrl.u32 %v1655, 7
    %v1657 = vsub.s32 0, %v1656
    %v1658 = vrot.slane %v1619, %v1657
    %v1660 = vadd.f32 %v1652, %v1658
    %v1661 = vadd.f32 %v1653, %v1658
    %v1662 = vpack.c.bf16 %v1661, %v1660
    %s1663 = scalar_lea.vmem %s11, 16
    %v1664 = vld [vmem:[%s1663] sm:$0xf]
    %v1665 = vld [vmem:[%s1663 + $0x4] sm:$0xf]
    %v1666 = vld [vmem:[%s1663 + $0x8] sm:$0xf]
    %v1667 = vld [vmem:[%s1663 + $0xc] sm:$0xf]
    %s1668 = scalar_lea.vmem %s12, 1
    %v1669 = vld [vmem:[%s1668] sm:$0x1]
    %v1671 = vlaneseq
    %v1672 = vshrl.u32 %v1671, 7
    %v1673 = vsub.s32 0, %v1672
    %v1674 = vrot.slane %v1669, %v1673
    %v1680 = vunpack.c.l.b16 %v1664
    %v1681 = vunpack.c.l.b16 %v1665
    %v1682 = vunpack.c.l.b16 %v1666
    %v1683 = vunpack.c.l.b16 %v1667
    %v1684 = vpack.c.b16 %v1681, %v1680
    %v1685 = vpack.c.b16 %v1683, %v1682
    %v1689 = vsel %vm91, %v1662, 0
    %1691 = vmatprep.subr.bf16.mxu0 0
    %1692 = vmatpush1.bf16.msra.mxu0 %v1684
    %1693 = vmatprep.subr.bf16.mxu0 0
    %1694 = vmatpush1.bf16.msra.mxu0 %v1685
    %1695 = vmatprep.subr.bf16.mxu0 0
    %1696 = vmatpush1.bf16.msra.mxu0 0
    %1697 = vmatprep.subr.bf16.mxu0 0
    %1698 = vmatpush1.bf16.msra.mxu0 0
    %1699 = vmatprep.subr.bf16.mxu0 0
    %1700 = vmatpush1.bf16.msra.mxu0 0
    %1701 = vmatprep.subr.bf16.mxu0 0
    %1702 = vmatpush1.bf16.msra.mxu0 0
    %1703 = vmatprep.subr.bf16.mxu0 0
    %1704 = vmatpush1.bf16.msra.mxu0 0
    %1705 = vmatprep.subr.bf16.mxu0 0
    %1706 = vmatpush1.bf16.msra.mxu0 0
    %1707 = vmatprep.subr.bf16.mxu0 0
    %1708 = vmatpush1.bf16.msra.mxu0 0
    %1709 = vmatprep.subr.bf16.mxu0 0
    %1710 = vmatpush1.bf16.msra.mxu0 0
    %1711 = vmatprep.subr.bf16.mxu0 0
    %1712 = vmatpush1.bf16.msra.mxu0 0
    %1713 = vmatprep.subr.bf16.mxu0 0
    %1714 = vmatpush1.bf16.msra.mxu0 0
    %1715 = vmatprep.subr.bf16.mxu0 0
    %1716 = vmatpush1.bf16.msra.mxu0 0
    %1717 = vmatprep.subr.bf16.mxu0 0
    %1718 = vmatpush1.bf16.msra.mxu0 0
    %1719 = vmatprep.subr.bf16.mxu0 0
    %1720 = vmatpush1.bf16.msra.mxu0 0
    %1721 = vmatprep.subr.bf16.mxu0 0
    %1722 = vmatpush1.bf16.msra.mxu0 0
    %1723 = vmatprep.mubr.bf16.mxu0 0
    %1724 = vmatmul.mubr.bf16.gmra.mrb[0].mxu0 %v1689
    %v1725 = vpop.f32.mrb[0].mxu0
    %v1726 = vadd.f32 %v1674, %v1725
    %v1727 = vpop.f32.mrb[0].mxu0
    %v1728 = vpop.f32.mrb[0].mxu0
    %v1729 = vadd.f32 %v1674, %v1728
    %v1730 = vpop.f32.mrb[0].mxu0
    %1731 = vdwg.mxu0
    %v1732 = vmul.f32 %v1726, 0.5
    %v1733 = vmul.f32 %v1729, 0.5
    %v1734 = vmul.f32 %v1726, %v848
    %v1735 = vmul.f32 %v1729, %v848
    %v1736 = verf.f32.pop %v1734
    %v1737 = verf.f32.pop %v1735
    %v1738 = vadd.f32 %v1736, 1.0
    %v1739 = vadd.f32 %v1737, 1.0
    %v1740 = vmul.f32 %v1732, %v1738
    %v1741 = vmul.f32 %v1733, %v1739
    %v1742 = vpack.c.bf16 %v1741, %v1740
    %s1743 = scalar_lea.vmem %s13, 64
    %v1744 = vld [vmem:[%s1743] sm:$0xf]
    %v1745 = vld [vmem:[%s1743 + $0x4] sm:$0xf]
    %v1746 = vld [vmem:[%s1743 + $0x8] sm:$0xf]
    %v1747 = vld [vmem:[%s1743 + $0xc] sm:$0xf]
    %v1748 = vld [vmem:[%s1743 + $0x10] sm:$0xf]
    %v1749 = vld [vmem:[%s1743 + $0x14] sm:$0xf]
    %v1750 = vld [vmem:[%s1743 + $0x18] sm:$0xf]
    %v1751 = vld [vmem:[%s1743 + $0x1c] sm:$0xf]
    %v1752 = vld [vmem:[%s1743 + $0x20] sm:$0xf]
    %v1753 = vld [vmem:[%s1743 + $0x24] sm:$0xf]
    %v1754 = vld [vmem:[%s1743 + $0x28] sm:$0xf]
    %v1755 = vld [vmem:[%s1743 + $0x2c] sm:$0xf]
    %v1756 = vld [vmem:[%s1743 + $0x30] sm:$0xf]
    %v1757 = vld [vmem:[%s1743 + $0x34] sm:$0xf]
    %v1758 = vld [vmem:[%s1743 + $0x38] sm:$0xf]
    %v1759 = vld [vmem:[%s1743 + $0x3c] sm:$0xf]
    %s1760 = scalar_lea.vmem %s14, 1
    %v1761 = vld [vmem:[%s1760] sm:$0x1]
    %v1763 = vlaneseq
    %v1764 = vshrl.u32 %v1763, 7
    %v1765 = vsub.s32 0, %v1764
    %v1766 = vrot.slane %v1761, %v1765
    %v1784 = vunpack.c.l.b16 %v1744
    %v1785 = vunpack.c.l.b16 %v1745
    %v1786 = vunpack.c.l.b16 %v1746
    %v1787 = vunpack.c.l.b16 %v1747
    %v1788 = vunpack.c.l.b16 %v1748
    %v1789 = vunpack.c.l.b16 %v1749
    %v1790 = vunpack.c.l.b16 %v1750
    %v1791 = vunpack.c.l.b16 %v1751
    %v1792 = vunpack.c.l.b16 %v1752
    %v1793 = vunpack.c.l.b16 %v1753
    %v1794 = vunpack.c.l.b16 %v1754
    %v1795 = vunpack.c.l.b16 %v1755
    %v1796 = vunpack.c.l.b16 %v1756
    %v1797 = vunpack.c.l.b16 %v1757
    %v1798 = vunpack.c.l.b16 %v1758
    %v1799 = vunpack.c.l.b16 %v1759
    %v1800 = vpack.c.b16 %v1785, %v1784
    %v1801 = vpack.c.b16 %v1787, %v1786
    %v1802 = vpack.c.b16 %v1789, %v1788
    %v1803 = vpack.c.b16 %v1791, %v1790
    %v1804 = vpack.c.b16 %v1793, %v1792
    %v1805 = vpack.c.b16 %v1795, %v1794
    %v1806 = vpack.c.b16 %v1797, %v1796
    %v1807 = vpack.c.b16 %v1799, %v1798
    %1816 = vmatprep.subr.bf16.mxu0 0
    %1817 = vmatpush1.bf16.msra.mxu0 %v1800
    %1818 = vmatprep.subr.bf16.mxu0 0
    %1819 = vmatpush1.bf16.msra.mxu0 %v1801
    %1820 = vmatprep.subr.bf16.mxu0 0
    %1821 = vmatpush1.bf16.msra.mxu0 %v1802
    %1822 = vmatprep.subr.bf16.mxu0 0
    %1823 = vmatpush1.bf16.msra.mxu0 %v1803
    %1824 = vmatprep.subr.bf16.mxu0 0
    %1825 = vmatpush1.bf16.msra.mxu0 %v1804
    %1826 = vmatprep.subr.bf16.mxu0 0
    %1827 = vmatpush1.bf16.msra.mxu0 %v1805
    %1828 = vmatprep.subr.bf16.mxu0 0
    %1829 = vmatpush1.bf16.msra.mxu0 %v1806
    %1830 = vmatprep.subr.bf16.mxu0 0
    %1831 = vmatpush1.bf16.msra.mxu0 %v1807
    %1832 = vmatprep.subr.bf16.mxu0 0
    %1833 = vmatpush1.bf16.msra.mxu0 0
    %1834 = vmatprep.subr.bf16.mxu0 0
    %1835 = vmatpush1.bf16.msra.mxu0 0
    %1836 = vmatprep.subr.bf16.mxu0 0
    %1837 = vmatpush1.bf16.msra.mxu0 0
    %1838 = vmatprep.subr.bf16.mxu0 0
    %1839 = vmatpush1.bf16.msra.mxu0 0
    %1840 = vmatprep.subr.bf16.mxu0 0
    %1841 = vmatpush1.bf16.msra.mxu0 0
    %1842 = vmatprep.subr.bf16.mxu0 0
    %1843 = vmatpush1.bf16.msra.mxu0 0
    %1844 = vmatprep.subr.bf16.mxu0 0
    %1845 = vmatpush1.bf16.msra.mxu0 0
    %1846 = vmatprep.subr.bf16.mxu0 0
    %1847 = vmatpush1.bf16.msra.mxu0 0
    %1848 = vmatprep.mubr.bf16.mxu0 0
    %1849 = vmatmul.mubr.bf16.gmra.mrb[0].mxu0 %v1742
    %v1850 = vpop.f32.mrb[0].mxu0
    %v1851 = vadd.f32 %v1766, %v1850
    %v1852 = vpop.f32.mrb[0].mxu0
    %v1853 = vpop.f32.mrb[0].mxu0
    %v1854 = vadd.f32 %v1766, %v1853
    %v1855 = vpop.f32.mrb[0].mxu0
    %1856 = vdwg.mxu0
    %v1857 = vadd.f32 %v1851, %v1660
    %v1858 = vadd.f32 %v1854, %v1661
    %s1859 = scalar_lea.vmem %s15, 1
    %v1860 = vld [vmem:[%s1859] sm:$0x1]
    %s1861 = scalar_lea.vmem %s16, 1
    %v1862 = vld [vmem:[%s1861] sm:$0x1]
    %v1863 = vsel %vm91, %v1857, 0.0
    %1864 = vadd.xlane.f32.xlu0 %v1863
    %v1865 = vpop.xlane.xlu0 %1864
    %v1866 = vsel %vm91, %v1858, 0.0
    %1867 = vadd.xlane.f32.xlu0 %v1866
    %v1868 = vpop.xlane.xlu0 %1867
    %v1869 = vmul.f32 %v1865, %v98
    %v1870 = vmul.f32 %v1868, %v98
    %v1871 = vsub.f32 %v1857, %v1869
    %v1872 = vsub.f32 %v1858, %v1870
    %v1873 = vmul.f32 %v1871, %v1871
    %v1874 = vmul.f32 %v1872, %v1872
    %v1875 = vsel %vm91, %v1873, 0.0
    %1876 = vadd.xlane.f32.xlu0 %v1875
    %v1877 = vpop.xlane.xlu0 %1876
    %v1878 = vsel %vm91, %v1874, 0.0
    %1879 = vadd.xlane.f32.xlu0 %v1878
    %v1880 = vpop.xlane.xlu0 %1879
    %v1881 = vmul.f32 %v1877, %v98
    %v1882 = vmul.f32 %v1880, %v98
    %v1883 = vadd.f32 %v1881, 1e-12
    %v1884 = vadd.f32 %v1882, 1e-12
    %v1885 = vrsqrt.pop %v1883
    %v1886 = vrsqrt.pop %v1884
    %v1887 = vmul.f32 %v1871, %v1885
    %v1888 = vmul.f32 %v1872, %v1886
    %v1890 = vlaneseq
    %v1891 = vshrl.u32 %v1890, 7
    %v1892 = vsub.s32 0, %v1891
    %v1893 = vrot.slane %v1860, %v1892
    %v1895 = vmul.f32 %v1893, %v1887
    %v1896 = vmul.f32 %v1893, %v1888
    %v1898 = vlaneseq
    %v1899 = vshrl.u32 %v1898, 7
    %v1900 = vsub.s32 0, %v1899
    %v1901 = vrot.slane %v1862, %v1900
    %v1903 = vadd.f32 %v1895, %v1901
    %v1904 = vadd.f32 %v1896, %v1901
    %1905 = vst.msk [vmem:[#allocation2] sm:$0xff] %vm91, %v1903
    %1906 = vst.msk [vmem:[#allocation2 + $0x8] sm:$0xff] %vm91, %v1904
    // Predicated region
    $region70: #{tpu_custom_call.1} parent=1 // pred_check
      _
    $region71: #{tpu_custom_call.1} parent=1 // pred_check_branch
      %1908 = sbr.rel (0) target = $region73
    $region72: #{tpu_custom_call.1} parent=1 // pred_region
      %s1910 = ssub.s32 256, 256
      %1911 = vsyncadd [#allocation3], %s1910
      %s1912 = sshll.u32 [#allocation2], 4
      %s1913 = int_to_ptr.vmem [resolvable:$true] %s1912
      %1918 = dma.vmem_to_hbm [thread:$0]  %s1913, 256, %s17, [#allocation3], 128, 128, 8
    $region73: #{tpu_custom_call.1} parent=1 // pred_fallthru
      _
    // Predicated region
    $region74: #{tpu_custom_call.1} parent=1 // pred_check
      _
    $region75: #{tpu_custom_call.1} parent=1 // pred_check_branch
      %1920 = sbr.rel (0) target = $region77
    $region76: #{tpu_custom_call.1} parent=1 // pred_region
      %1921 = dma.done [#allocation3], 256
    $region77: #{tpu_custom_call.1} parent=1 // pred_fallthru
      _
    %1922 = vsyncpa [#allocation3], 1

</llo_original>
